<compile_context>
chip_gen: v7x
topology: tpu7x:2x2x1
jax: 0.10.0
libtpu: 0.0.40
codegen_flags: <defaults>
</compile_context>

<pallas_src>
import functools
import math

import numpy as np
import jax
import jax.numpy as jnp
from jax.experimental import pallas as pl
from jax.experimental.pallas import tpu as pltpu

# ----------------------------- configuration ------------------------------
TASK_NAME = "long_term_forecast"
SEQ_LEN = 16           # configs.seq_len   (must be divisible by 2**num_levels)
PRED_LEN = 8           # configs.pred_len
ENC_IN = 8             # configs.enc_in
HID = int(ENC_IN * 1)  # hid_size = 1 because 'ETT' in configs.data
NUM_LEVELS = 2         # the fused kernel below is specialised to the 3-node tree
DTYPE = jnp.float32


# --------------------------- fused Pallas kernel ---------------------------
@functools.lru_cache(maxsize=None)
def _make_fused_call(B, D, Dh, T, P, dtype_name):
    """Build the single fused pallas_call for the whole SCINet forward."""
    out_dtype = jnp.dtype(dtype_name)
    L1 = T // 2   # sub-series length after the level-1 split

    def kernel(x_ref, pe_ref, w1_ref, b1_ref, w2_ref, b2_ref, wp_ref, o_ref):
        f32 = jnp.float32

        def mm(a, b):
            return jnp.dot(a, b, preferred_element_type=f32)

        def take_cols(a, idx):
            # exact even/odd de-interleave along the lane (time) axis
            return jnp.concatenate([a[:, i:i + 1] for i in idx], axis=1)

        def pad_rep3(a):
            # ReplicationPad1d((3, 3)) along time, built in-register
            left = jnp.broadcast_to(a[:, 0:1], (D, 3))
            right = jnp.broadcast_to(a[:, a.shape[1] - 1:a.shape[1]], (D, 3))
            return jnp.concatenate([left, a, right], axis=1)

        def im2col(a, K, Lout):
            # rows ordered tap-major: row k*C + c  <->  a[c, t + k]
            return jnp.concatenate([a[:, k:k + Lout] for k in range(K)], axis=0)

        def branch_pair(xa, xb, n, s):
            # Evaluates (f_a(xa), f_b(xb)) for one pair of interactor branches with
            # block-diagonal packed weights:
            #   ReplicationPad -> Conv1d(k=5) -> LeakyReLU(0.01) -> [Dropout=id] ->
            #   Conv1d(k=3) -> tanh
            L = xa.shape[1]
            X = jnp.concatenate([im2col(pad_rep3(xa), 5, L + 2),
                                 im2col(pad_rep3(xb), 5, L + 2)], axis=0)   # (10D, L+2)
            h = mm(w1_ref[n, s], X) + b1_ref[n, s]                          # (2Dh, L+2)
            h = jnp.where(h > 0, h, 0.01 * h)                               # LeakyReLU
            y = jnp.tanh(mm(w2_ref[n, s], im2col(h, 3, L)) + b2_ref[n, s])  # (2D, L)
            return y[0:D, :], y[D:2 * D, :]

        def interact(xe, xo, n):
            phi_xe, psi_xo = branch_pair(xe, xo, n, 0)   # phi(x_even), psi(x_odd)
            d = xo * jnp.exp(phi_xe)
            c = xe * jnp.exp(psi_xo)
            u_d, p_c = branch_pair(d, c, n, 1)           # U(d), P(c)
            return c + u_d, d - p_c                      # (even_update, odd_update)

        # positional encoding add (positionalE=True)
        x = x_ref[...].astype(f32) + pe_ref[...].astype(f32)        # (D, T)

        # level-1 split + root interactor (tree node 0)
        e1, o1 = interact(take_cols(x, range(0, T, 2)),
                          take_cols(x, range(1, T, 2)), 0)           # (D, T/2) each

        # level-2 splits + leaf interactors (tree nodes 1 = even child, 2 = odd child)
        ee, eo = interact(take_cols(e1, range(0, L1, 2)),
                          take_cols(e1, range(1, L1, 2)), 1)         # (D, T/4) each
        oe, oo = interact(take_cols(o1, range(0, L1, 2)),
                          take_cols(o1, range(1, L1, 2)), 2)

        # zip_up_the_pants + residual + Conv1d(seq_len->pred_len, k=1, bias=False)
        # folded into one matmul: wp rows are [W^T ; W^T[0::4] ; W^T[2::4] ;
        # W^T[1::4] ; W^T[3::4]] (host-permuted in pack_params), matching the
        # concatenation order [x, ee, eo, oe, oo] and the zip positions
        # t%4 == 0->ee, 1->oe, 2->eo, 3->oo.
        proj_in = jnp.concatenate([x, ee, eo, oe, oo], axis=1)       # (D, 2T)
        o_ref[...] = mm(proj_in, wp_ref[...]).astype(o_ref.dtype)    # (D, P)

    grid_spec = pltpu.PrefetchScalarGridSpec(
        num_scalar_prefetch=0,
        grid=(B,),
        in_specs=[
            pl.BlockSpec((None, D, T), lambda b: (b, 0, 0)),          # x (channel-major)
            pl.BlockSpec((D, T), lambda b: (0, 0)),                   # positional encoding
            pl.BlockSpec((3, 2, 2 * Dh, 10 * D), lambda b: (0, 0, 0, 0)),   # conv1 weights
            pl.BlockSpec((3, 2, 2 * Dh, 1), lambda b: (0, 0, 0, 0)),        # conv1 biases
            pl.BlockSpec((3, 2, 2 * D, 6 * Dh), lambda b: (0, 0, 0, 0)),    # conv2 weights
            pl.BlockSpec((3, 2, 2 * D, 1), lambda b: (0, 0, 0, 0)),         # conv2 biases
            pl.BlockSpec((2 * T, P), lambda b: (0, 0)),               # packed projection
        ],
        out_specs=pl.BlockSpec((None, D, P), lambda b: (b, 0, 0)),
    )
    return pl.pallas_call(
        kernel,
        out_shape=jax.ShapeDtypeStruct((B, D, P), out_dtype),
        grid_spec=grid_spec,
        compiler_params=pltpu.CompilerParams(dimension_semantics=("parallel",)),
    )


def scinet_forward_pallas(x_enc, packed):
    """x_enc: [B, T, D] -> [B, pred_len, D] via the single fused kernel."""
    B, T, D = x_enc.shape
    Dh = packed["w1"].shape[2] // 2
    P = packed["wp"].shape[1]
    # layout plumbing only: present channel-major (C, time) tiles to the kernel
    x_cm = jnp.transpose(x_enc, (0, 2, 1))                     # (B, D, T)
    call = _make_fused_call(B, D, Dh, T, P, jnp.dtype(x_enc.dtype).name)
    out_cm = call(x_cm, packed["pe"], packed["w1"], packed["b1"],
                  packed["w2"], packed["b2"], packed["wp"])    # (B, D, P)
    return jnp.transpose(out_cm, (0, 2, 1))                    # (B, P, D)


def model_forward_pallas(x_enc, x_mark_enc, x_dec, x_mark_dec, packed, *, pred_len):
    # task_name == 'long_term_forecast' (other task branches reuse the same SCINet core)
    dec_out = scinet_forward_pallas(x_enc, packed)
    return dec_out[:, -pred_len:, :]


# ----------------- pure-JAX reference (validation only) --------------------
def _conv1d_ref(x, w, b):
    # x: [B, Ci, L]; w: [K, Co, Ci]; b: [Co, 1]
    K = w.shape[0]
    Lo = x.shape[2] - K + 1
    acc = jnp.zeros((x.shape[0], w.shape[1], Lo), jnp.float32)
    for k in range(K):
        acc = acc + jnp.einsum("oi,bit->bot", w[k], x[:, :, k:k + Lo])
    return acc + b[None, :, :]


def _branch_ref(x, w1, b1, w2, b2):
    xp = jnp.pad(x, ((0, 0), (0, 0), (3, 3)), mode="edge")
    h = _conv1d_ref(xp, w1, b1)
    h = jnp.where(h > 0, h, 0.01 * h)
    return jnp.tanh(_conv1d_ref(h, w2, b2))


def ref_interactor(x, node):
    xe = jnp.transpose(x[:, 0::2, :], (0, 2, 1))
    xo = jnp.transpose(x[:, 1::2, :], (0, 2, 1))
    w1, b1, w2, b2 = node["w1"], node["b1"], node["w2"], node["b2"]
    d = xo * jnp.exp(_branch_ref(xe, w1[0], b1[0], w2[0], b2[0]))
    c = xe * jnp.exp(_branch_ref(xo, w1[1], b1[1], w2[1], b2[1]))
    e = c + _branch_ref(d, w1[2], b1[2], w2[2], b2[2])
    o = d - _branch_ref(c, w1[3], b1[3], w2[3], b2[3])
    return jnp.transpose(e, (0, 2, 1)), jnp.transpose(o, (0, 2, 1))


def _zip_up(even, odd):
    B, L, D = even.shape
    return jnp.stack([even, odd], axis=2).reshape(B, 2 * L, D)


def _scinet_tree_ref(x, tree_params):
    e, o = ref_interactor(x, tree_params["node"])
    if "even" in tree_params:
        e = _scinet_tree_ref(e, tree_params["even"])
        o = _scinet_tree_ref(o, tree_params["odd"])
    return _zip_up(e, o)


def _position_encoding(T, D):
    # Follows SCINet.get_position_encoding (inv_timescales use
    # log(10000) / max(num_timescales - 1, 1)).
    pe_hidden = D + (D % 2)
    nts = pe_hidden // 2
    lti = math.log(10000.0) / max(nts - 1, 1)
    inv = jnp.exp(jnp.arange(nts, dtype=jnp.float32) * (-lti))
    pos = jnp.arange(T, dtype=jnp.float32)
    scaled = pos[:, None] * inv[None, :]
    sig = jnp.concatenate([jnp.sin(scaled), jnp.cos(scaled)], axis=1)
    sig = sig.reshape(1, T, pe_hidden)
    if pe_hidden > D:
        sig = sig[:, :, :-1]
    return sig


def scinet_forward_ref(x_enc, params):
    B, T, D = x_enc.shape
    assert T % (2 ** NUM_LEVELS) == 0
    x = x_enc + _position_encoding(T, D).astype(x_enc.dtype)   # positionalE=True
    res1 = x
    x = _scinet_tree_ref(x, params["tree"])                    # EncoderTree (blocks1)
    x = x + res1
    return jnp.einsum("pt,btd->bpd", params["proj_w"], x)      # projection1


def model_forward_ref(x_enc, x_mark_enc, x_dec, x_mark_dec, params, *, pred_len):
    dec_out = scinet_forward_ref(x_enc, params)
    return dec_out[:, -pred_len:, :]


# ------------------------- deterministic parameters ------------------------
def _init_node(key, D, Dh):
    k1, k2, k3, k4 = jax.random.split(key, 4)
    # branch order: [phi, psi, U, P];  weight layout [branch, K, Cout, Cin]
    return {
        "w1": (0.1 * jax.random.normal(k1, (4, 5, Dh, D))).astype(DTYPE),
        "b1": (0.1 * jax.random.normal(k2, (4, Dh, 1))).astype(DTYPE),
        "w2": (0.1 * jax.random.normal(k3, (4, 3, D, Dh))).astype(DTYPE),
        "b2": (0.1 * jax.random.normal(k4, (4, D, 1))).astype(DTYPE),
    }


def _init_tree(key, D, Dh, level):
    kn, ke, ko = jax.random.split(key, 3)
    p = {"node": _init_node(kn, D, Dh)}
    if level > 0:
        p["even"] = _init_tree(ke, D, Dh, level - 1)
        p["odd"] = _init_tree(ko, D, Dh, level - 1)
    return p


def init_params(key, seq_len, pred_len, enc_in, hid, num_levels):
    kt, kp = jax.random.split(key)
    return {
        "tree": _init_tree(kt, enc_in, hid, num_levels - 1),
        "proj_w": (0.1 * jax.random.normal(kp, (pred_len, seq_len))).astype(DTYPE),
    }


def pack_params(params, seq_len, enc_in):
    """Host-side (one-off) repacking into the lane-dense, block-diagonal im2col
    layouts consumed by the fused kernel."""
    assert NUM_LEVELS == 2, "fused kernel is specialised to the 2-level / 3-node tree"
    D, T = enc_in, seq_len
    tree = params["tree"]
    nodes = [tree["node"], tree["even"]["node"], tree["odd"]["node"]]   # root, even, odd
    Dh = nodes[0]["w1"].shape[2]

    W1 = np.zeros((3, 2, 2 * Dh, 10 * D), np.float32)   # conv1: im2col row = k*D + ci
    B1 = np.zeros((3, 2, 2 * Dh, 1), np.float32)
    W2 = np.zeros((3, 2, 2 * D, 6 * Dh), np.float32)    # conv2: im2col row = k*2Dh + c
    B2 = np.zeros((3, 2, 2 * D, 1), np.float32)
    for n, node in enumerate(nodes):
        w1 = np.asarray(node["w1"], np.float32)   # (4, 5, Dh, D)
        b1 = np.asarray(node["b1"], np.float32)   # (4, Dh, 1)
        w2 = np.asarray(node["w2"], np.float32)   # (4, 3, D, Dh)
        b2 = np.asarray(node["b2"], np.float32)   # (4, D, 1)
        # stage 0 pairs (phi, psi) on (x_even, x_odd); stage 1 pairs (U, P) on (d, c)
        for s, (ba, bb) in enumerate(((0, 1), (2, 3))):
            for k in range(5):
                W1[n, s, 0:Dh, k * D:(k + 1) * D] = w1[ba, k]
                W1[n, s, Dh:2 * Dh, 5 * D + k * D:5 * D + (k + 1) * D] = w1[bb, k]
            for k in range(3):
                W2[n, s, 0:D, k * 2 * Dh:k * 2 * Dh + Dh] = w2[ba, k]
                W2[n, s, D:2 * D, k * 2 * Dh + Dh:(k + 1) * 2 * Dh] = w2[bb, k]
            B1[n, s, 0:Dh] = b1[ba]
            B1[n, s, Dh:2 * Dh] = b1[bb]
            B2[n, s, 0:D] = b2[ba]
            B2[n, s, D:2 * D] = b2[bb]

    pe_cm = np.asarray(_position_encoding(T, D), np.float32)[0].T       # (D, T)

    # zip_up positions: t%4==0 -> ee, 1 -> oe, 2 -> eo, 3 -> oo.  Fold zip + residual +
    # projection into a single matmul against [x, ee, eo, oe, oo] concatenated on lanes.
    WpT = np.asarray(params["proj_w"], np.float32).T                    # (T, P)
    Wpack = np.concatenate(
        [WpT, WpT[0::4], WpT[2::4], WpT[1::4], WpT[3::4]], axis=0)      # (2T, P)

    return {
        "w1": jnp.asarray(W1), "b1": jnp.asarray(B1),
        "w2": jnp.asarray(W2), "b2": jnp.asarray(B2),
        "pe": jnp.asarray(pe_cm), "wp": jnp.asarray(Wpack),
    }


# ---------------------------------- main -----------------------------------
if __name__ == "__main__":
    key = jax.random.PRNGKey(0)
    kp, kx = jax.random.split(key)
    params = init_params(kp, SEQ_LEN, PRED_LEN, ENC_IN, HID, NUM_LEVELS)
    packed = pack_params(params, SEQ_LEN, ENC_IN)

    B = 2
    x_enc = jax.random.normal(kx, (B, SEQ_LEN, ENC_IN), dtype=DTYPE)
    x_mark_enc = jnp.zeros((B, SEQ_LEN, 4), dtype=DTYPE)    # unused in forecast path
    x_dec = jnp.zeros((B, PRED_LEN, ENC_IN), dtype=DTYPE)   # unused
    x_mark_dec = jnp.zeros((B, PRED_LEN, 4), dtype=DTYPE)   # unused

    fwd = jax.jit(functools.partial(model_forward_pallas, pred_len=PRED_LEN))
    out = jax.block_until_ready(fwd(x_enc, x_mark_enc, x_dec, x_mark_dec, packed))

    # Validate against a pure-JAX reference of the same forward math.
    ref = jax.block_until_ready(
        model_forward_ref(x_enc, x_mark_enc, x_dec, x_mark_dec, params,
                          pred_len=PRED_LEN))

    assert out.shape == (B, PRED_LEN, ENC_IN), out.shape
    np.testing.assert_allclose(np.asarray(out), np.asarray(ref), rtol=5e-3, atol=5e-3)
    print("KERNEL_OK")
</pallas_src>

<mosaic_0001>
module attributes {stable_mosaic.version = 11 : i64} {
  func.func @kernel(%arg0: i32, %arg1: memref<1x8x16xf32, #tpu.memory_space<vmem>>, %arg2: memref<8x16xf32, #tpu.memory_space<vmem>>, %arg3: memref<3x2x16x80xf32, #tpu.memory_space<vmem>>, %arg4: memref<3x2x16x1xf32, #tpu.memory_space<vmem>>, %arg5: memref<3x2x16x48xf32, #tpu.memory_space<vmem>>, %arg6: memref<3x2x16x1xf32, #tpu.memory_space<vmem>>, %arg7: memref<32x8xf32, #tpu.memory_space<vmem>>, %arg8: memref<1x8x8xf32, #tpu.memory_space<vmem>>) attributes {dimension_semantics = [#tpu.dimension_semantics<parallel>], iteration_bounds = array<i64: 2>, scalar_prefetch = 0 : i64, scratch_operands = 0 : i64, tpu.core_type = #tpu.core_type<tc>, window_params = [{transform_indices = @transform_0, window_bounds = array<i64: 1, 8, 16>}, {pipeline_mode = #tpu.pipeline_mode<synchronous>, transform_indices = @transform_1, window_bounds = array<i64: 8, 16>}, {pipeline_mode = #tpu.pipeline_mode<synchronous>, transform_indices = @transform_2, window_bounds = array<i64: 3, 2, 16, 80>}, {pipeline_mode = #tpu.pipeline_mode<synchronous>, transform_indices = @transform_3, window_bounds = array<i64: 3, 2, 16, 1>}, {pipeline_mode = #tpu.pipeline_mode<synchronous>, transform_indices = @transform_4, window_bounds = array<i64: 3, 2, 16, 48>}, {pipeline_mode = #tpu.pipeline_mode<synchronous>, transform_indices = @transform_5, window_bounds = array<i64: 3, 2, 16, 1>}, {pipeline_mode = #tpu.pipeline_mode<synchronous>, transform_indices = @transform_6, window_bounds = array<i64: 32, 8>}, {transform_indices = @transform_7, window_bounds = array<i64: 1, 8, 8>}]} {
    %c0 = arith.constant 0 : index
    %c0_0 = arith.constant 0 : index
    %c0_1 = arith.constant 0 : index
    %0 = vector.load %arg1[%c0, %c0_0, %c0_1] : memref<1x8x16xf32, #tpu.memory_space<vmem>>, vector<1x8x16xf32>
    %1 = vector.shape_cast %0 : vector<1x8x16xf32> to vector<8x16xf32>
    %c0_2 = arith.constant 0 : index
    %c0_3 = arith.constant 0 : index
    %2 = vector.load %arg2[%c0_2, %c0_3] : memref<8x16xf32, #tpu.memory_space<vmem>>, vector<8x16xf32>
    %3 = arith.addf %1, %2 : vector<8x16xf32>
    %4 = vector.extract_strided_slice %3 {offsets = [0, 0], sizes = [8, 1], strides = [1, 1]} : vector<8x16xf32> to vector<8x1xf32>
    %5 = vector.extract_strided_slice %3 {offsets = [0, 2], sizes = [8, 1], strides = [1, 1]} : vector<8x16xf32> to vector<8x1xf32>
    %6 = vector.extract_strided_slice %3 {offsets = [0, 4], sizes = [8, 1], strides = [1, 1]} : vector<8x16xf32> to vector<8x1xf32>
    %7 = vector.extract_strided_slice %3 {offsets = [0, 6], sizes = [8, 1], strides = [1, 1]} : vector<8x16xf32> to vector<8x1xf32>
    %8 = vector.extract_strided_slice %3 {offsets = [0, 8], sizes = [8, 1], strides = [1, 1]} : vector<8x16xf32> to vector<8x1xf32>
    %9 = vector.extract_strided_slice %3 {offsets = [0, 10], sizes = [8, 1], strides = [1, 1]} : vector<8x16xf32> to vector<8x1xf32>
    %10 = vector.extract_strided_slice %3 {offsets = [0, 12], sizes = [8, 1], strides = [1, 1]} : vector<8x16xf32> to vector<8x1xf32>
    %11 = vector.extract_strided_slice %3 {offsets = [0, 14], sizes = [8, 1], strides = [1, 1]} : vector<8x16xf32> to vector<8x1xf32>
    %12 = tpu.concatenate %4, %5, %6, %7, %8, %9, %10, %11 in 1 : vector<8x1xf32>, vector<8x1xf32>, vector<8x1xf32>, vector<8x1xf32>, vector<8x1xf32>, vector<8x1xf32>, vector<8x1xf32>, vector<8x1xf32> -> vector<8x8xf32>
    %13 = vector.extract_strided_slice %3 {offsets = [0, 1], sizes = [8, 1], strides = [1, 1]} : vector<8x16xf32> to vector<8x1xf32>
    %14 = vector.extract_strided_slice %3 {offsets = [0, 3], sizes = [8, 1], strides = [1, 1]} : vector<8x16xf32> to vector<8x1xf32>
    %15 = vector.extract_strided_slice %3 {offsets = [0, 5], sizes = [8, 1], strides = [1, 1]} : vector<8x16xf32> to vector<8x1xf32>
    %16 = vector.extract_strided_slice %3 {offsets = [0, 7], sizes = [8, 1], strides = [1, 1]} : vector<8x16xf32> to vector<8x1xf32>
    %17 = vector.extract_strided_slice %3 {offsets = [0, 9], sizes = [8, 1], strides = [1, 1]} : vector<8x16xf32> to vector<8x1xf32>
    %18 = vector.extract_strided_slice %3 {offsets = [0, 11], sizes = [8, 1], strides = [1, 1]} : vector<8x16xf32> to vector<8x1xf32>
    %19 = vector.extract_strided_slice %3 {offsets = [0, 13], sizes = [8, 1], strides = [1, 1]} : vector<8x16xf32> to vector<8x1xf32>
    %20 = vector.extract_strided_slice %3 {offsets = [0, 15], sizes = [8, 1], strides = [1, 1]} : vector<8x16xf32> to vector<8x1xf32>
    %21 = tpu.concatenate %13, %14, %15, %16, %17, %18, %19, %20 in 1 : vector<8x1xf32>, vector<8x1xf32>, vector<8x1xf32>, vector<8x1xf32>, vector<8x1xf32>, vector<8x1xf32>, vector<8x1xf32>, vector<8x1xf32> -> vector<8x8xf32>
    %22 = vector.extract_strided_slice %12 {offsets = [0, 0], sizes = [8, 1], strides = [1, 1]} : vector<8x8xf32> to vector<8x1xf32>
    %23 = vector.shape_cast %22 : vector<8x1xf32> to vector<8x1xf32>
    %24 = vector.broadcast %23 : vector<8x1xf32> to vector<8x3xf32>
    %25 = vector.extract_strided_slice %12 {offsets = [0, 7], sizes = [8, 1], strides = [1, 1]} : vector<8x8xf32> to vector<8x1xf32>
    %26 = vector.shape_cast %25 : vector<8x1xf32> to vector<8x1xf32>
    %27 = vector.broadcast %26 : vector<8x1xf32> to vector<8x3xf32>
    %28 = tpu.concatenate %24, %12, %27 in 1 : vector<8x3xf32>, vector<8x8xf32>, vector<8x3xf32> -> vector<8x14xf32>
    %29 = vector.extract_strided_slice %28 {offsets = [0, 0], sizes = [8, 10], strides = [1, 1]} : vector<8x14xf32> to vector<8x10xf32>
    %30 = vector.extract_strided_slice %28 {offsets = [0, 1], sizes = [8, 10], strides = [1, 1]} : vector<8x14xf32> to vector<8x10xf32>
    %31 = vector.extract_strided_slice %28 {offsets = [0, 2], sizes = [8, 10], strides = [1, 1]} : vector<8x14xf32> to vector<8x10xf32>
    %32 = vector.extract_strided_slice %28 {offsets = [0, 3], sizes = [8, 10], strides = [1, 1]} : vector<8x14xf32> to vector<8x10xf32>
    %33 = vector.extract_strided_slice %28 {offsets = [0, 4], sizes = [8, 10], strides = [1, 1]} : vector<8x14xf32> to vector<8x10xf32>
    %34 = tpu.concatenate %29, %30, %31, %32, %33 in 0 : vector<8x10xf32>, vector<8x10xf32>, vector<8x10xf32>, vector<8x10xf32>, vector<8x10xf32> -> vector<40x10xf32>
    %35 = vector.extract_strided_slice %21 {offsets = [0, 0], sizes = [8, 1], strides = [1, 1]} : vector<8x8xf32> to vector<8x1xf32>
    %36 = vector.shape_cast %35 : vector<8x1xf32> to vector<8x1xf32>
    %37 = vector.broadcast %36 : vector<8x1xf32> to vector<8x3xf32>
    %38 = vector.extract_strided_slice %21 {offsets = [0, 7], sizes = [8, 1], strides = [1, 1]} : vector<8x8xf32> to vector<8x1xf32>
    %39 = vector.shape_cast %38 : vector<8x1xf32> to vector<8x1xf32>
    %40 = vector.broadcast %39 : vector<8x1xf32> to vector<8x3xf32>
    %41 = tpu.concatenate %37, %21, %40 in 1 : vector<8x3xf32>, vector<8x8xf32>, vector<8x3xf32> -> vector<8x14xf32>
    %42 = vector.extract_strided_slice %41 {offsets = [0, 0], sizes = [8, 10], strides = [1, 1]} : vector<8x14xf32> to vector<8x10xf32>
    %43 = vector.extract_strided_slice %41 {offsets = [0, 1], sizes = [8, 10], strides = [1, 1]} : vector<8x14xf32> to vector<8x10xf32>
    %44 = vector.extract_strided_slice %41 {offsets = [0, 2], sizes = [8, 10], strides = [1, 1]} : vector<8x14xf32> to vector<8x10xf32>
    %45 = vector.extract_strided_slice %41 {offsets = [0, 3], sizes = [8, 10], strides = [1, 1]} : vector<8x14xf32> to vector<8x10xf32>
    %46 = vector.extract_strided_slice %41 {offsets = [0, 4], sizes = [8, 10], strides = [1, 1]} : vector<8x14xf32> to vector<8x10xf32>
    %47 = tpu.concatenate %42, %43, %44, %45, %46 in 0 : vector<8x10xf32>, vector<8x10xf32>, vector<8x10xf32>, vector<8x10xf32>, vector<8x10xf32> -> vector<40x10xf32>
    %48 = tpu.concatenate %34, %47 in 0 : vector<40x10xf32>, vector<40x10xf32> -> vector<80x10xf32>
    %c0_4 = arith.constant 0 : index
    %c0_5 = arith.constant 0 : index
    %c0_6 = arith.constant 0 : index
    %c0_7 = arith.constant 0 : index
    %49 = vector.load %arg3[%c0_4, %c0_5, %c0_6, %c0_7] : memref<3x2x16x80xf32, #tpu.memory_space<vmem>>, vector<1x1x16x80xf32>
    %50 = vector.shape_cast %49 : vector<1x1x16x80xf32> to vector<16x80xf32>
    %cst = arith.constant dense<0.000000e+00> : vector<16x10xf32>
    %51 = tpu.matmul %50, %48, %cst {dimension_numbers = #tpu.dot_dimension_numbers<[1], [0], [0], [1], [0, 0, 1, 1], [], []>} : vector<16x80xf32>, vector<80x10xf32>, vector<16x10xf32> -> vector<16x10xf32>
    %c0_8 = arith.constant 0 : index
    %c0_9 = arith.constant 0 : index
    %c0_10 = arith.constant 0 : index
    %c0_11 = arith.constant 0 : index
    %52 = vector.load %arg4[%c0_8, %c0_9, %c0_10, %c0_11] : memref<3x2x16x1xf32, #tpu.memory_space<vmem>>, vector<1x1x16x1xf32>
    %53 = vector.shape_cast %52 : vector<1x1x16x1xf32> to vector<16x1xf32>
    %54 = vector.broadcast %53 : vector<16x1xf32> to vector<16x10xf32>
    %55 = arith.addf %51, %54 : vector<16x10xf32>
    %cst_12 = arith.constant 0.000000e+00 : f32
    %56 = vector.broadcast %cst_12 : f32 to vector<16x10xf32>
    %57 = arith.cmpf ogt, %55, %56 : vector<16x10xf32>
    %cst_13 = arith.constant 0.00999999977 : f32
    %58 = vector.broadcast %cst_13 : f32 to vector<16x10xf32>
    %59 = arith.mulf %58, %55 : vector<16x10xf32>
    %60 = arith.select %57, %55, %59 : vector<16x10xi1>, vector<16x10xf32>
    %c0_14 = arith.constant 0 : index
    %c0_15 = arith.constant 0 : index
    %c0_16 = arith.constant 0 : index
    %c0_17 = arith.constant 0 : index
    %61 = vector.load %arg5[%c0_14, %c0_15, %c0_16, %c0_17] : memref<3x2x16x48xf32, #tpu.memory_space<vmem>>, vector<1x1x16x48xf32>
    %62 = vector.shape_cast %61 : vector<1x1x16x48xf32> to vector<16x48xf32>
    %63 = vector.extract_strided_slice %60 {offsets = [0, 0], sizes = [16, 8], strides = [1, 1]} : vector<16x10xf32> to vector<16x8xf32>
    %64 = vector.extract_strided_slice %60 {offsets = [0, 1], sizes = [16, 8], strides = [1, 1]} : vector<16x10xf32> to vector<16x8xf32>
    %65 = vector.extract_strided_slice %60 {offsets = [0, 2], sizes = [16, 8], strides = [1, 1]} : vector<16x10xf32> to vector<16x8xf32>
    %66 = tpu.concatenate %63, %64, %65 in 0 : vector<16x8xf32>, vector<16x8xf32>, vector<16x8xf32> -> vector<48x8xf32>
    %cst_18 = arith.constant dense<0.000000e+00> : vector<16x8xf32>
    %67 = tpu.matmul %62, %66, %cst_18 {dimension_numbers = #tpu.dot_dimension_numbers<[1], [0], [0], [1], [0, 0, 1, 1], [], []>} : vector<16x48xf32>, vector<48x8xf32>, vector<16x8xf32> -> vector<16x8xf32>
    %c0_19 = arith.constant 0 : index
    %c0_20 = arith.constant 0 : index
    %c0_21 = arith.constant 0 : index
    %c0_22 = arith.constant 0 : index
    %68 = vector.load %arg6[%c0_19, %c0_20, %c0_21, %c0_22] : memref<3x2x16x1xf32, #tpu.memory_space<vmem>>, vector<1x1x16x1xf32>
    %69 = vector.shape_cast %68 : vector<1x1x16x1xf32> to vector<16x1xf32>
    %70 = vector.broadcast %69 : vector<16x1xf32> to vector<16x8xf32>
    %71 = arith.addf %67, %70 : vector<16x8xf32>
    %72 = math.tanh %71 : vector<16x8xf32>
    %73 = vector.extract_strided_slice %72 {offsets = [0, 0], sizes = [8, 8], strides = [1, 1]} : vector<16x8xf32> to vector<8x8xf32>
    %74 = vector.extract_strided_slice %72 {offsets = [8, 0], sizes = [8, 8], strides = [1, 1]} : vector<16x8xf32> to vector<8x8xf32>
    %75 = math.exp %73 : vector<8x8xf32>
    %76 = arith.mulf %21, %75 : vector<8x8xf32>
    %77 = math.exp %74 : vector<8x8xf32>
    %78 = arith.mulf %12, %77 : vector<8x8xf32>
    %79 = vector.extract_strided_slice %76 {offsets = [0, 0], sizes = [8, 1], strides = [1, 1]} : vector<8x8xf32> to vector<8x1xf32>
    %80 = vector.shape_cast %79 : vector<8x1xf32> to vector<8x1xf32>
    %81 = vector.broadcast %80 : vector<8x1xf32> to vector<8x3xf32>
    %82 = vector.extract_strided_slice %76 {offsets = [0, 7], sizes = [8, 1], strides = [1, 1]} : vector<8x8xf32> to vector<8x1xf32>
    %83 = vector.shape_cast %82 : vector<8x1xf32> to vector<8x1xf32>
    %84 = vector.broadcast %83 : vector<8x1xf32> to vector<8x3xf32>
    %85 = tpu.concatenate %81, %76, %84 in 1 : vector<8x3xf32>, vector<8x8xf32>, vector<8x3xf32> -> vector<8x14xf32>
    %86 = vector.extract_strided_slice %85 {offsets = [0, 0], sizes = [8, 10], strides = [1, 1]} : vector<8x14xf32> to vector<8x10xf32>
    %87 = vector.extract_strided_slice %85 {offsets = [0, 1], sizes = [8, 10], strides = [1, 1]} : vector<8x14xf32> to vector<8x10xf32>
    %88 = vector.extract_strided_slice %85 {offsets = [0, 2], sizes = [8, 10], strides = [1, 1]} : vector<8x14xf32> to vector<8x10xf32>
    %89 = vector.extract_strided_slice %85 {offsets = [0, 3], sizes = [8, 10], strides = [1, 1]} : vector<8x14xf32> to vector<8x10xf32>
    %90 = vector.extract_strided_slice %85 {offsets = [0, 4], sizes = [8, 10], strides = [1, 1]} : vector<8x14xf32> to vector<8x10xf32>
    %91 = tpu.concatenate %86, %87, %88, %89, %90 in 0 : vector<8x10xf32>, vector<8x10xf32>, vector<8x10xf32>, vector<8x10xf32>, vector<8x10xf32> -> vector<40x10xf32>
    %92 = vector.extract_strided_slice %78 {offsets = [0, 0], sizes = [8, 1], strides = [1, 1]} : vector<8x8xf32> to vector<8x1xf32>
    %93 = vector.shape_cast %92 : vector<8x1xf32> to vector<8x1xf32>
    %94 = vector.broadcast %93 : vector<8x1xf32> to vector<8x3xf32>
    %95 = vector.extract_strided_slice %78 {offsets = [0, 7], sizes = [8, 1], strides = [1, 1]} : vector<8x8xf32> to vector<8x1xf32>
    %96 = vector.shape_cast %95 : vector<8x1xf32> to vector<8x1xf32>
    %97 = vector.broadcast %96 : vector<8x1xf32> to vector<8x3xf32>
    %98 = tpu.concatenate %94, %78, %97 in 1 : vector<8x3xf32>, vector<8x8xf32>, vector<8x3xf32> -> vector<8x14xf32>
    %99 = vector.extract_strided_slice %98 {offsets = [0, 0], sizes = [8, 10], strides = [1, 1]} : vector<8x14xf32> to vector<8x10xf32>
    %100 = vector.extract_strided_slice %98 {offsets = [0, 1], sizes = [8, 10], strides = [1, 1]} : vector<8x14xf32> to vector<8x10xf32>
    %101 = vector.extract_strided_slice %98 {offsets = [0, 2], sizes = [8, 10], strides = [1, 1]} : vector<8x14xf32> to vector<8x10xf32>
    %102 = vector.extract_strided_slice %98 {offsets = [0, 3], sizes = [8, 10], strides = [1, 1]} : vector<8x14xf32> to vector<8x10xf32>
    %103 = vector.extract_strided_slice %98 {offsets = [0, 4], sizes = [8, 10], strides = [1, 1]} : vector<8x14xf32> to vector<8x10xf32>
    %104 = tpu.concatenate %99, %100, %101, %102, %103 in 0 : vector<8x10xf32>, vector<8x10xf32>, vector<8x10xf32>, vector<8x10xf32>, vector<8x10xf32> -> vector<40x10xf32>
    %105 = tpu.concatenate %91, %104 in 0 : vector<40x10xf32>, vector<40x10xf32> -> vector<80x10xf32>
    %c0_23 = arith.constant 0 : index
    %c1 = arith.constant 1 : index
    %c0_24 = arith.constant 0 : index
    %c0_25 = arith.constant 0 : index
    %106 = vector.load %arg3[%c0_23, %c1, %c0_24, %c0_25] : memref<3x2x16x80xf32, #tpu.memory_space<vmem>>, vector<1x1x16x80xf32>
    %107 = vector.shape_cast %106 : vector<1x1x16x80xf32> to vector<16x80xf32>
    %cst_26 = arith.constant dense<0.000000e+00> : vector<16x10xf32>
    %108 = tpu.matmul %107, %105, %cst_26 {dimension_numbers = #tpu.dot_dimension_numbers<[1], [0], [0], [1], [0, 0, 1, 1], [], []>} : vector<16x80xf32>, vector<80x10xf32>, vector<16x10xf32> -> vector<16x10xf32>
    %c0_27 = arith.constant 0 : index
    %c1_28 = arith.constant 1 : index
    %c0_29 = arith.constant 0 : index
    %c0_30 = arith.constant 0 : index
    %109 = vector.load %arg4[%c0_27, %c1_28, %c0_29, %c0_30] : memref<3x2x16x1xf32, #tpu.memory_space<vmem>>, vector<1x1x16x1xf32>
    %110 = vector.shape_cast %109 : vector<1x1x16x1xf32> to vector<16x1xf32>
    %111 = vector.broadcast %110 : vector<16x1xf32> to vector<16x10xf32>
    %112 = arith.addf %108, %111 : vector<16x10xf32>
    %cst_31 = arith.constant 0.000000e+00 : f32
    %113 = vector.broadcast %cst_31 : f32 to vector<16x10xf32>
    %114 = arith.cmpf ogt, %112, %113 : vector<16x10xf32>
    %cst_32 = arith.constant 0.00999999977 : f32
    %115 = vector.broadcast %cst_32 : f32 to vector<16x10xf32>
    %116 = arith.mulf %115, %112 : vector<16x10xf32>
    %117 = arith.select %114, %112, %116 : vector<16x10xi1>, vector<16x10xf32>
    %c0_33 = arith.constant 0 : index
    %c1_34 = arith.constant 1 : index
    %c0_35 = arith.constant 0 : index
    %c0_36 = arith.constant 0 : index
    %118 = vector.load %arg5[%c0_33, %c1_34, %c0_35, %c0_36] : memref<3x2x16x48xf32, #tpu.memory_space<vmem>>, vector<1x1x16x48xf32>
    %119 = vector.shape_cast %118 : vector<1x1x16x48xf32> to vector<16x48xf32>
    %120 = vector.extract_strided_slice %117 {offsets = [0, 0], sizes = [16, 8], strides = [1, 1]} : vector<16x10xf32> to vector<16x8xf32>
    %121 = vector.extract_strided_slice %117 {offsets = [0, 1], sizes = [16, 8], strides = [1, 1]} : vector<16x10xf32> to vector<16x8xf32>
    %122 = vector.extract_strided_slice %117 {offsets = [0, 2], sizes = [16, 8], strides = [1, 1]} : vector<16x10xf32> to vector<16x8xf32>
    %123 = tpu.concatenate %120, %121, %122 in 0 : vector<16x8xf32>, vector<16x8xf32>, vector<16x8xf32> -> vector<48x8xf32>
    %cst_37 = arith.constant dense<0.000000e+00> : vector<16x8xf32>
    %124 = tpu.matmul %119, %123, %cst_37 {dimension_numbers = #tpu.dot_dimension_numbers<[1], [0], [0], [1], [0, 0, 1, 1], [], []>} : vector<16x48xf32>, vector<48x8xf32>, vector<16x8xf32> -> vector<16x8xf32>
    %c0_38 = arith.constant 0 : index
    %c1_39 = arith.constant 1 : index
    %c0_40 = arith.constant 0 : index
    %c0_41 = arith.constant 0 : index
    %125 = vector.load %arg6[%c0_38, %c1_39, %c0_40, %c0_41] : memref<3x2x16x1xf32, #tpu.memory_space<vmem>>, vector<1x1x16x1xf32>
    %126 = vector.shape_cast %125 : vector<1x1x16x1xf32> to vector<16x1xf32>
    %127 = vector.broadcast %126 : vector<16x1xf32> to vector<16x8xf32>
    %128 = arith.addf %124, %127 : vector<16x8xf32>
    %129 = math.tanh %128 : vector<16x8xf32>
    %130 = vector.extract_strided_slice %129 {offsets = [0, 0], sizes = [8, 8], strides = [1, 1]} : vector<16x8xf32> to vector<8x8xf32>
    %131 = vector.extract_strided_slice %129 {offsets = [8, 0], sizes = [8, 8], strides = [1, 1]} : vector<16x8xf32> to vector<8x8xf32>
    %132 = arith.addf %78, %130 : vector<8x8xf32>
    %133 = arith.subf %76, %131 : vector<8x8xf32>
    %134 = vector.extract_strided_slice %132 {offsets = [0, 0], sizes = [8, 1], strides = [1, 1]} : vector<8x8xf32> to vector<8x1xf32>
    %135 = vector.extract_strided_slice %132 {offsets = [0, 2], sizes = [8, 1], strides = [1, 1]} : vector<8x8xf32> to vector<8x1xf32>
    %136 = vector.extract_strided_slice %132 {offsets = [0, 4], sizes = [8, 1], strides = [1, 1]} : vector<8x8xf32> to vector<8x1xf32>
    %137 = vector.extract_strided_slice %132 {offsets = [0, 6], sizes = [8, 1], strides = [1, 1]} : vector<8x8xf32> to vector<8x1xf32>
    %138 = tpu.concatenate %134, %135, %136, %137 in 1 : vector<8x1xf32>, vector<8x1xf32>, vector<8x1xf32>, vector<8x1xf32> -> vector<8x4xf32>
    %139 = vector.extract_strided_slice %132 {offsets = [0, 1], sizes = [8, 1], strides = [1, 1]} : vector<8x8xf32> to vector<8x1xf32>
    %140 = vector.extract_strided_slice %132 {offsets = [0, 3], sizes = [8, 1], strides = [1, 1]} : vector<8x8xf32> to vector<8x1xf32>
    %141 = vector.extract_strided_slice %132 {offsets = [0, 5], sizes = [8, 1], strides = [1, 1]} : vector<8x8xf32> to vector<8x1xf32>
    %142 = vector.extract_strided_slice %132 {offsets = [0, 7], sizes = [8, 1], strides = [1, 1]} : vector<8x8xf32> to vector<8x1xf32>
    %143 = tpu.concatenate %139, %140, %141, %142 in 1 : vector<8x1xf32>, vector<8x1xf32>, vector<8x1xf32>, vector<8x1xf32> -> vector<8x4xf32>
    %144 = vector.extract_strided_slice %138 {offsets = [0, 0], sizes = [8, 1], strides = [1, 1]} : vector<8x4xf32> to vector<8x1xf32>
    %145 = vector.shape_cast %144 : vector<8x1xf32> to vector<8x1xf32>
    %146 = vector.broadcast %145 : vector<8x1xf32> to vector<8x3xf32>
    %147 = vector.extract_strided_slice %138 {offsets = [0, 3], sizes = [8, 1], strides = [1, 1]} : vector<8x4xf32> to vector<8x1xf32>
    %148 = vector.shape_cast %147 : vector<8x1xf32> to vector<8x1xf32>
    %149 = vector.broadcast %148 : vector<8x1xf32> to vector<8x3xf32>
    %150 = tpu.concatenate %146, %138, %149 in 1 : vector<8x3xf32>, vector<8x4xf32>, vector<8x3xf32> -> vector<8x10xf32>
    %151 = vector.extract_strided_slice %150 {offsets = [0, 0], sizes = [8, 6], strides = [1, 1]} : vector<8x10xf32> to vector<8x6xf32>
    %152 = vector.extract_strided_slice %150 {offsets = [0, 1], sizes = [8, 6], strides = [1, 1]} : vector<8x10xf32> to vector<8x6xf32>
    %153 = vector.extract_strided_slice %150 {offsets = [0, 2], sizes = [8, 6], strides = [1, 1]} : vector<8x10xf32> to vector<8x6xf32>
    %154 = vector.extract_strided_slice %150 {offsets = [0, 3], sizes = [8, 6], strides = [1, 1]} : vector<8x10xf32> to vector<8x6xf32>
    %155 = vector.extract_strided_slice %150 {offsets = [0, 4], sizes = [8, 6], strides = [1, 1]} : vector<8x10xf32> to vector<8x6xf32>
    %156 = tpu.concatenate %151, %152, %153, %154, %155 in 0 : vector<8x6xf32>, vector<8x6xf32>, vector<8x6xf32>, vector<8x6xf32>, vector<8x6xf32> -> vector<40x6xf32>
    %157 = vector.extract_strided_slice %143 {offsets = [0, 0], sizes = [8, 1], strides = [1, 1]} : vector<8x4xf32> to vector<8x1xf32>
    %158 = vector.shape_cast %157 : vector<8x1xf32> to vector<8x1xf32>
    %159 = vector.broadcast %158 : vector<8x1xf32> to vector<8x3xf32>
    %160 = vector.extract_strided_slice %143 {offsets = [0, 3], sizes = [8, 1], strides = [1, 1]} : vector<8x4xf32> to vector<8x1xf32>
    %161 = vector.shape_cast %160 : vector<8x1xf32> to vector<8x1xf32>
    %162 = vector.broadcast %161 : vector<8x1xf32> to vector<8x3xf32>
    %163 = tpu.concatenate %159, %143, %162 in 1 : vector<8x3xf32>, vector<8x4xf32>, vector<8x3xf32> -> vector<8x10xf32>
    %164 = vector.extract_strided_slice %163 {offsets = [0, 0], sizes = [8, 6], strides = [1, 1]} : vector<8x10xf32> to vector<8x6xf32>
    %165 = vector.extract_strided_slice %163 {offsets = [0, 1], sizes = [8, 6], strides = [1, 1]} : vector<8x10xf32> to vector<8x6xf32>
    %166 = vector.extract_strided_slice %163 {offsets = [0, 2], sizes = [8, 6], strides = [1, 1]} : vector<8x10xf32> to vector<8x6xf32>
    %167 = vector.extract_strided_slice %163 {offsets = [0, 3], sizes = [8, 6], strides = [1, 1]} : vector<8x10xf32> to vector<8x6xf32>
    %168 = vector.extract_strided_slice %163 {offsets = [0, 4], sizes = [8, 6], strides = [1, 1]} : vector<8x10xf32> to vector<8x6xf32>
    %169 = tpu.concatenate %164, %165, %166, %167, %168 in 0 : vector<8x6xf32>, vector<8x6xf32>, vector<8x6xf32>, vector<8x6xf32>, vector<8x6xf32> -> vector<40x6xf32>
    %170 = tpu.concatenate %156, %169 in 0 : vector<40x6xf32>, vector<40x6xf32> -> vector<80x6xf32>
    %c1_42 = arith.constant 1 : index
    %c0_43 = arith.constant 0 : index
    %c0_44 = arith.constant 0 : index
    %c0_45 = arith.constant 0 : index
    %171 = vector.load %arg3[%c1_42, %c0_43, %c0_44, %c0_45] : memref<3x2x16x80xf32, #tpu.memory_space<vmem>>, vector<1x1x16x80xf32>
    %172 = vector.shape_cast %171 : vector<1x1x16x80xf32> to vector<16x80xf32>
    %cst_46 = arith.constant dense<0.000000e+00> : vector<16x6xf32>
    %173 = tpu.matmul %172, %170, %cst_46 {dimension_numbers = #tpu.dot_dimension_numbers<[1], [0], [0], [1], [0, 0, 1, 1], [], []>} : vector<16x80xf32>, vector<80x6xf32>, vector<16x6xf32> -> vector<16x6xf32>
    %c1_47 = arith.constant 1 : index
    %c0_48 = arith.constant 0 : index
    %c0_49 = arith.constant 0 : index
    %c0_50 = arith.constant 0 : index
    %174 = vector.load %arg4[%c1_47, %c0_48, %c0_49, %c0_50] : memref<3x2x16x1xf32, #tpu.memory_space<vmem>>, vector<1x1x16x1xf32>
    %175 = vector.shape_cast %174 : vector<1x1x16x1xf32> to vector<16x1xf32>
    %176 = vector.broadcast %175 : vector<16x1xf32> to vector<16x6xf32>
    %177 = arith.addf %173, %176 : vector<16x6xf32>
    %cst_51 = arith.constant 0.000000e+00 : f32
    %178 = vector.broadcast %cst_51 : f32 to vector<16x6xf32>
    %179 = arith.cmpf ogt, %177, %178 : vector<16x6xf32>
    %cst_52 = arith.constant 0.00999999977 : f32
    %180 = vector.broadcast %cst_52 : f32 to vector<16x6xf32>
    %181 = arith.mulf %180, %177 : vector<16x6xf32>
    %182 = arith.select %179, %177, %181 : vector<16x6xi1>, vector<16x6xf32>
    %c1_53 = arith.constant 1 : index
    %c0_54 = arith.constant 0 : index
    %c0_55 = arith.constant 0 : index
    %c0_56 = arith.constant 0 : index
    %183 = vector.load %arg5[%c1_53, %c0_54, %c0_55, %c0_56] : memref<3x2x16x48xf32, #tpu.memory_space<vmem>>, vector<1x1x16x48xf32>
    %184 = vector.shape_cast %183 : vector<1x1x16x48xf32> to vector<16x48xf32>
    %185 = vector.extract_strided_slice %182 {offsets = [0, 0], sizes = [16, 4], strides = [1, 1]} : vector<16x6xf32> to vector<16x4xf32>
    %186 = vector.extract_strided_slice %182 {offsets = [0, 1], sizes = [16, 4], strides = [1, 1]} : vector<16x6xf32> to vector<16x4xf32>
    %187 = vector.extract_strided_slice %182 {offsets = [0, 2], sizes = [16, 4], strides = [1, 1]} : vector<16x6xf32> to vector<16x4xf32>
    %188 = tpu.concatenate %185, %186, %187 in 0 : vector<16x4xf32>, vector<16x4xf32>, vector<16x4xf32> -> vector<48x4xf32>
    %cst_57 = arith.constant dense<0.000000e+00> : vector<16x4xf32>
    %189 = tpu.matmul %184, %188, %cst_57 {dimension_numbers = #tpu.dot_dimension_numbers<[1], [0], [0], [1], [0, 0, 1, 1], [], []>} : vector<16x48xf32>, vector<48x4xf32>, vector<16x4xf32> -> vector<16x4xf32>
    %c1_58 = arith.constant 1 : index
    %c0_59 = arith.constant 0 : index
    %c0_60 = arith.constant 0 : index
    %c0_61 = arith.constant 0 : index
    %190 = vector.load %arg6[%c1_58, %c0_59, %c0_60, %c0_61] : memref<3x2x16x1xf32, #tpu.memory_space<vmem>>, vector<1x1x16x1xf32>
    %191 = vector.shape_cast %190 : vector<1x1x16x1xf32> to vector<16x1xf32>
    %192 = vector.broadcast %191 : vector<16x1xf32> to vector<16x4xf32>
    %193 = arith.addf %189, %192 : vector<16x4xf32>
    %194 = math.tanh %193 : vector<16x4xf32>
    %195 = vector.extract_strided_slice %194 {offsets = [0, 0], sizes = [8, 4], strides = [1, 1]} : vector<16x4xf32> to vector<8x4xf32>
    %196 = vector.extract_strided_slice %194 {offsets = [8, 0], sizes = [8, 4], strides = [1, 1]} : vector<16x4xf32> to vector<8x4xf32>
    %197 = math.exp %195 : vector<8x4xf32>
    %198 = arith.mulf %143, %197 : vector<8x4xf32>
    %199 = math.exp %196 : vector<8x4xf32>
    %200 = arith.mulf %138, %199 : vector<8x4xf32>
    %201 = vector.extract_strided_slice %198 {offsets = [0, 0], sizes = [8, 1], strides = [1, 1]} : vector<8x4xf32> to vector<8x1xf32>
    %202 = vector.shape_cast %201 : vector<8x1xf32> to vector<8x1xf32>
    %203 = vector.broadcast %202 : vector<8x1xf32> to vector<8x3xf32>
    %204 = vector.extract_strided_slice %198 {offsets = [0, 3], sizes = [8, 1], strides = [1, 1]} : vector<8x4xf32> to vector<8x1xf32>
    %205 = vector.shape_cast %204 : vector<8x1xf32> to vector<8x1xf32>
    %206 = vector.broadcast %205 : vector<8x1xf32> to vector<8x3xf32>
    %207 = tpu.concatenate %203, %198, %206 in 1 : vector<8x3xf32>, vector<8x4xf32>, vector<8x3xf32> -> vector<8x10xf32>
    %208 = vector.extract_strided_slice %207 {offsets = [0, 0], sizes = [8, 6], strides = [1, 1]} : vector<8x10xf32> to vector<8x6xf32>
    %209 = vector.extract_strided_slice %207 {offsets = [0, 1], sizes = [8, 6], strides = [1, 1]} : vector<8x10xf32> to vector<8x6xf32>
    %210 = vector.extract_strided_slice %207 {offsets = [0, 2], sizes = [8, 6], strides = [1, 1]} : vector<8x10xf32> to vector<8x6xf32>
    %211 = vector.extract_strided_slice %207 {offsets = [0, 3], sizes = [8, 6], strides = [1, 1]} : vector<8x10xf32> to vector<8x6xf32>
    %212 = vector.extract_strided_slice %207 {offsets = [0, 4], sizes = [8, 6], strides = [1, 1]} : vector<8x10xf32> to vector<8x6xf32>
    %213 = tpu.concatenate %208, %209, %210, %211, %212 in 0 : vector<8x6xf32>, vector<8x6xf32>, vector<8x6xf32>, vector<8x6xf32>, vector<8x6xf32> -> vector<40x6xf32>
    %214 = vector.extract_strided_slice %200 {offsets = [0, 0], sizes = [8, 1], strides = [1, 1]} : vector<8x4xf32> to vector<8x1xf32>
    %215 = vector.shape_cast %214 : vector<8x1xf32> to vector<8x1xf32>
    %216 = vector.broadcast %215 : vector<8x1xf32> to vector<8x3xf32>
    %217 = vector.extract_strided_slice %200 {offsets = [0, 3], sizes = [8, 1], strides = [1, 1]} : vector<8x4xf32> to vector<8x1xf32>
    %218 = vector.shape_cast %217 : vector<8x1xf32> to vector<8x1xf32>
    %219 = vector.broadcast %218 : vector<8x1xf32> to vector<8x3xf32>
    %220 = tpu.concatenate %216, %200, %219 in 1 : vector<8x3xf32>, vector<8x4xf32>, vector<8x3xf32> -> vector<8x10xf32>
    %221 = vector.extract_strided_slice %220 {offsets = [0, 0], sizes = [8, 6], strides = [1, 1]} : vector<8x10xf32> to vector<8x6xf32>
    %222 = vector.extract_strided_slice %220 {offsets = [0, 1], sizes = [8, 6], strides = [1, 1]} : vector<8x10xf32> to vector<8x6xf32>
    %223 = vector.extract_strided_slice %220 {offsets = [0, 2], sizes = [8, 6], strides = [1, 1]} : vector<8x10xf32> to vector<8x6xf32>
    %224 = vector.extract_strided_slice %220 {offsets = [0, 3], sizes = [8, 6], strides = [1, 1]} : vector<8x10xf32> to vector<8x6xf32>
    %225 = vector.extract_strided_slice %220 {offsets = [0, 4], sizes = [8, 6], strides = [1, 1]} : vector<8x10xf32> to vector<8x6xf32>
    %226 = tpu.concatenate %221, %222, %223, %224, %225 in 0 : vector<8x6xf32>, vector<8x6xf32>, vector<8x6xf32>, vector<8x6xf32>, vector<8x6xf32> -> vector<40x6xf32>
    %227 = tpu.concatenate %213, %226 in 0 : vector<40x6xf32>, vector<40x6xf32> -> vector<80x6xf32>
    %c1_62 = arith.constant 1 : index
    %c1_63 = arith.constant 1 : index
    %c0_64 = arith.constant 0 : index
    %c0_65 = arith.constant 0 : index
    %228 = vector.load %arg3[%c1_62, %c1_63, %c0_64, %c0_65] : memref<3x2x16x80xf32, #tpu.memory_space<vmem>>, vector<1x1x16x80xf32>
    %229 = vector.shape_cast %228 : vector<1x1x16x80xf32> to vector<16x80xf32>
    %cst_66 = arith.constant dense<0.000000e+00> : vector<16x6xf32>
    %230 = tpu.matmul %229, %227, %cst_66 {dimension_numbers = #tpu.dot_dimension_numbers<[1], [0], [0], [1], [0, 0, 1, 1], [], []>} : vector<16x80xf32>, vector<80x6xf32>, vector<16x6xf32> -> vector<16x6xf32>
    %c1_67 = arith.constant 1 : index
    %c1_68 = arith.constant 1 : index
    %c0_69 = arith.constant 0 : index
    %c0_70 = arith.constant 0 : index
    %231 = vector.load %arg4[%c1_67, %c1_68, %c0_69, %c0_70] : memref<3x2x16x1xf32, #tpu.memory_space<vmem>>, vector<1x1x16x1xf32>
    %232 = vector.shape_cast %231 : vector<1x1x16x1xf32> to vector<16x1xf32>
    %233 = vector.broadcast %232 : vector<16x1xf32> to vector<16x6xf32>
    %234 = arith.addf %230, %233 : vector<16x6xf32>
    %cst_71 = arith.constant 0.000000e+00 : f32
    %235 = vector.broadcast %cst_71 : f32 to vector<16x6xf32>
    %236 = arith.cmpf ogt, %234, %235 : vector<16x6xf32>
    %cst_72 = arith.constant 0.00999999977 : f32
    %237 = vector.broadcast %cst_72 : f32 to vector<16x6xf32>
    %238 = arith.mulf %237, %234 : vector<16x6xf32>
    %239 = arith.select %236, %234, %238 : vector<16x6xi1>, vector<16x6xf32>
    %c1_73 = arith.constant 1 : index
    %c1_74 = arith.constant 1 : index
    %c0_75 = arith.constant 0 : index
    %c0_76 = arith.constant 0 : index
    %240 = vector.load %arg5[%c1_73, %c1_74, %c0_75, %c0_76] : memref<3x2x16x48xf32, #tpu.memory_space<vmem>>, vector<1x1x16x48xf32>
    %241 = vector.shape_cast %240 : vector<1x1x16x48xf32> to vector<16x48xf32>
    %242 = vector.extract_strided_slice %239 {offsets = [0, 0], sizes = [16, 4], strides = [1, 1]} : vector<16x6xf32> to vector<16x4xf32>
    %243 = vector.extract_strided_slice %239 {offsets = [0, 1], sizes = [16, 4], strides = [1, 1]} : vector<16x6xf32> to vector<16x4xf32>
    %244 = vector.extract_strided_slice %239 {offsets = [0, 2], sizes = [16, 4], strides = [1, 1]} : vector<16x6xf32> to vector<16x4xf32>
    %245 = tpu.concatenate %242, %243, %244 in 0 : vector<16x4xf32>, vector<16x4xf32>, vector<16x4xf32> -> vector<48x4xf32>
    %cst_77 = arith.constant dense<0.000000e+00> : vector<16x4xf32>
    %246 = tpu.matmul %241, %245, %cst_77 {dimension_numbers = #tpu.dot_dimension_numbers<[1], [0], [0], [1], [0, 0, 1, 1], [], []>} : vector<16x48xf32>, vector<48x4xf32>, vector<16x4xf32> -> vector<16x4xf32>
    %c1_78 = arith.constant 1 : index
    %c1_79 = arith.constant 1 : index
    %c0_80 = arith.constant 0 : index
    %c0_81 = arith.constant 0 : index
    %247 = vector.load %arg6[%c1_78, %c1_79, %c0_80, %c0_81] : memref<3x2x16x1xf32, #tpu.memory_space<vmem>>, vector<1x1x16x1xf32>
    %248 = vector.shape_cast %247 : vector<1x1x16x1xf32> to vector<16x1xf32>
    %249 = vector.broadcast %248 : vector<16x1xf32> to vector<16x4xf32>
    %250 = arith.addf %246, %249 : vector<16x4xf32>
    %251 = math.tanh %250 : vector<16x4xf32>
    %252 = vector.extract_strided_slice %251 {offsets = [0, 0], sizes = [8, 4], strides = [1, 1]} : vector<16x4xf32> to vector<8x4xf32>
    %253 = vector.extract_strided_slice %251 {offsets = [8, 0], sizes = [8, 4], strides = [1, 1]} : vector<16x4xf32> to vector<8x4xf32>
    %254 = arith.addf %200, %252 : vector<8x4xf32>
    %255 = arith.subf %198, %253 : vector<8x4xf32>
    %256 = vector.extract_strided_slice %133 {offsets = [0, 0], sizes = [8, 1], strides = [1, 1]} : vector<8x8xf32> to vector<8x1xf32>
    %257 = vector.extract_strided_slice %133 {offsets = [0, 2], sizes = [8, 1], strides = [1, 1]} : vector<8x8xf32> to vector<8x1xf32>
    %258 = vector.extract_strided_slice %133 {offsets = [0, 4], sizes = [8, 1], strides = [1, 1]} : vector<8x8xf32> to vector<8x1xf32>
    %259 = vector.extract_strided_slice %133 {offsets = [0, 6], sizes = [8, 1], strides = [1, 1]} : vector<8x8xf32> to vector<8x1xf32>
    %260 = tpu.concatenate %256, %257, %258, %259 in 1 : vector<8x1xf32>, vector<8x1xf32>, vector<8x1xf32>, vector<8x1xf32> -> vector<8x4xf32>
    %261 = vector.extract_strided_slice %133 {offsets = [0, 1], sizes = [8, 1], strides = [1, 1]} : vector<8x8xf32> to vector<8x1xf32>
    %262 = vector.extract_strided_slice %133 {offsets = [0, 3], sizes = [8, 1], strides = [1, 1]} : vector<8x8xf32> to vector<8x1xf32>
    %263 = vector.extract_strided_slice %133 {offsets = [0, 5], sizes = [8, 1], strides = [1, 1]} : vector<8x8xf32> to vector<8x1xf32>
    %264 = vector.extract_strided_slice %133 {offsets = [0, 7], sizes = [8, 1], strides = [1, 1]} : vector<8x8xf32> to vector<8x1xf32>
    %265 = tpu.concatenate %261, %262, %263, %264 in 1 : vector<8x1xf32>, vector<8x1xf32>, vector<8x1xf32>, vector<8x1xf32> -> vector<8x4xf32>
    %266 = vector.extract_strided_slice %260 {offsets = [0, 0], sizes = [8, 1], strides = [1, 1]} : vector<8x4xf32> to vector<8x1xf32>
    %267 = vector.shape_cast %266 : vector<8x1xf32> to vector<8x1xf32>
    %268 = vector.broadcast %267 : vector<8x1xf32> to vector<8x3xf32>
    %269 = vector.extract_strided_slice %260 {offsets = [0, 3], sizes = [8, 1], strides = [1, 1]} : vector<8x4xf32> to vector<8x1xf32>
    %270 = vector.shape_cast %269 : vector<8x1xf32> to vector<8x1xf32>
    %271 = vector.broadcast %270 : vector<8x1xf32> to vector<8x3xf32>
    %272 = tpu.concatenate %268, %260, %271 in 1 : vector<8x3xf32>, vector<8x4xf32>, vector<8x3xf32> -> vector<8x10xf32>
    %273 = vector.extract_strided_slice %272 {offsets = [0, 0], sizes = [8, 6], strides = [1, 1]} : vector<8x10xf32> to vector<8x6xf32>
    %274 = vector.extract_strided_slice %272 {offsets = [0, 1], sizes = [8, 6], strides = [1, 1]} : vector<8x10xf32> to vector<8x6xf32>
    %275 = vector.extract_strided_slice %272 {offsets = [0, 2], sizes = [8, 6], strides = [1, 1]} : vector<8x10xf32> to vector<8x6xf32>
    %276 = vector.extract_strided_slice %272 {offsets = [0, 3], sizes = [8, 6], strides = [1, 1]} : vector<8x10xf32> to vector<8x6xf32>
    %277 = vector.extract_strided_slice %272 {offsets = [0, 4], sizes = [8, 6], strides = [1, 1]} : vector<8x10xf32> to vector<8x6xf32>
    %278 = tpu.concatenate %273, %274, %275, %276, %277 in 0 : vector<8x6xf32>, vector<8x6xf32>, vector<8x6xf32>, vector<8x6xf32>, vector<8x6xf32> -> vector<40x6xf32>
    %279 = vector.extract_strided_slice %265 {offsets = [0, 0], sizes = [8, 1], strides = [1, 1]} : vector<8x4xf32> to vector<8x1xf32>
    %280 = vector.shape_cast %279 : vector<8x1xf32> to vector<8x1xf32>
    %281 = vector.broadcast %280 : vector<8x1xf32> to vector<8x3xf32>
    %282 = vector.extract_strided_slice %265 {offsets = [0, 3], sizes = [8, 1], strides = [1, 1]} : vector<8x4xf32> to vector<8x1xf32>
    %283 = vector.shape_cast %282 : vector<8x1xf32> to vector<8x1xf32>
    %284 = vector.broadcast %283 : vector<8x1xf32> to vector<8x3xf32>
    %285 = tpu.concatenate %281, %265, %284 in 1 : vector<8x3xf32>, vector<8x4xf32>, vector<8x3xf32> -> vector<8x10xf32>
    %286 = vector.extract_strided_slice %285 {offsets = [0, 0], sizes = [8, 6], strides = [1, 1]} : vector<8x10xf32> to vector<8x6xf32>
    %287 = vector.extract_strided_slice %285 {offsets = [0, 1], sizes = [8, 6], strides = [1, 1]} : vector<8x10xf32> to vector<8x6xf32>
    %288 = vector.extract_strided_slice %285 {offsets = [0, 2], sizes = [8, 6], strides = [1, 1]} : vector<8x10xf32> to vector<8x6xf32>
    %289 = vector.extract_strided_slice %285 {offsets = [0, 3], sizes = [8, 6], strides = [1, 1]} : vector<8x10xf32> to vector<8x6xf32>
    %290 = vector.extract_strided_slice %285 {offsets = [0, 4], sizes = [8, 6], strides = [1, 1]} : vector<8x10xf32> to vector<8x6xf32>
    %291 = tpu.concatenate %286, %287, %288, %289, %290 in 0 : vector<8x6xf32>, vector<8x6xf32>, vector<8x6xf32>, vector<8x6xf32>, vector<8x6xf32> -> vector<40x6xf32>
    %292 = tpu.concatenate %278, %291 in 0 : vector<40x6xf32>, vector<40x6xf32> -> vector<80x6xf32>
    %c2 = arith.constant 2 : index
    %c0_82 = arith.constant 0 : index
    %c0_83 = arith.constant 0 : index
    %c0_84 = arith.constant 0 : index
    %293 = vector.load %arg3[%c2, %c0_82, %c0_83, %c0_84] : memref<3x2x16x80xf32, #tpu.memory_space<vmem>>, vector<1x1x16x80xf32>
    %294 = vector.shape_cast %293 : vector<1x1x16x80xf32> to vector<16x80xf32>
    %cst_85 = arith.constant dense<0.000000e+00> : vector<16x6xf32>
    %295 = tpu.matmul %294, %292, %cst_85 {dimension_numbers = #tpu.dot_dimension_numbers<[1], [0], [0], [1], [0, 0, 1, 1], [], []>} : vector<16x80xf32>, vector<80x6xf32>, vector<16x6xf32> -> vector<16x6xf32>
    %c2_86 = arith.constant 2 : index
    %c0_87 = arith.constant 0 : index
    %c0_88 = arith.constant 0 : index
    %c0_89 = arith.constant 0 : index
    %296 = vector.load %arg4[%c2_86, %c0_87, %c0_88, %c0_89] : memref<3x2x16x1xf32, #tpu.memory_space<vmem>>, vector<1x1x16x1xf32>
    %297 = vector.shape_cast %296 : vector<1x1x16x1xf32> to vector<16x1xf32>
    %298 = vector.broadcast %297 : vector<16x1xf32> to vector<16x6xf32>
    %299 = arith.addf %295, %298 : vector<16x6xf32>
    %cst_90 = arith.constant 0.000000e+00 : f32
    %300 = vector.broadcast %cst_90 : f32 to vector<16x6xf32>
    %301 = arith.cmpf ogt, %299, %300 : vector<16x6xf32>
    %cst_91 = arith.constant 0.00999999977 : f32
    %302 = vector.broadcast %cst_91 : f32 to vector<16x6xf32>
    %303 = arith.mulf %302, %299 : vector<16x6xf32>
    %304 = arith.select %301, %299, %303 : vector<16x6xi1>, vector<16x6xf32>
    %c2_92 = arith.constant 2 : index
    %c0_93 = arith.constant 0 : index
    %c0_94 = arith.constant 0 : index
    %c0_95 = arith.constant 0 : index
    %305 = vector.load %arg5[%c2_92, %c0_93, %c0_94, %c0_95] : memref<3x2x16x48xf32, #tpu.memory_space<vmem>>, vector<1x1x16x48xf32>
    %306 = vector.shape_cast %305 : vector<1x1x16x48xf32> to vector<16x48xf32>
    %307 = vector.extract_strided_slice %304 {offsets = [0, 0], sizes = [16, 4], strides = [1, 1]} : vector<16x6xf32> to vector<16x4xf32>
    %308 = vector.extract_strided_slice %304 {offsets = [0, 1], sizes = [16, 4], strides = [1, 1]} : vector<16x6xf32> to vector<16x4xf32>
    %309 = vector.extract_strided_slice %304 {offsets = [0, 2], sizes = [16, 4], strides = [1, 1]} : vector<16x6xf32> to vector<16x4xf32>
    %310 = tpu.concatenate %307, %308, %309 in 0 : vector<16x4xf32>, vector<16x4xf32>, vector<16x4xf32> -> vector<48x4xf32>
    %cst_96 = arith.constant dense<0.000000e+00> : vector<16x4xf32>
    %311 = tpu.matmul %306, %310, %cst_96 {dimension_numbers = #tpu.dot_dimension_numbers<[1], [0], [0], [1], [0, 0, 1, 1], [], []>} : vector<16x48xf32>, vector<48x4xf32>, vector<16x4xf32> -> vector<16x4xf32>
    %c2_97 = arith.constant 2 : index
    %c0_98 = arith.constant 0 : index
    %c0_99 = arith.constant 0 : index
    %c0_100 = arith.constant 0 : index
    %312 = vector.load %arg6[%c2_97, %c0_98, %c0_99, %c0_100] : memref<3x2x16x1xf32, #tpu.memory_space<vmem>>, vector<1x1x16x1xf32>
    %313 = vector.shape_cast %312 : vector<1x1x16x1xf32> to vector<16x1xf32>
    %314 = vector.broadcast %313 : vector<16x1xf32> to vector<16x4xf32>
    %315 = arith.addf %311, %314 : vector<16x4xf32>
    %316 = math.tanh %315 : vector<16x4xf32>
    %317 = vector.extract_strided_slice %316 {offsets = [0, 0], sizes = [8, 4], strides = [1, 1]} : vector<16x4xf32> to vector<8x4xf32>
    %318 = vector.extract_strided_slice %316 {offsets = [8, 0], sizes = [8, 4], strides = [1, 1]} : vector<16x4xf32> to vector<8x4xf32>
    %319 = math.exp %317 : vector<8x4xf32>
    %320 = arith.mulf %265, %319 : vector<8x4xf32>
    %321 = math.exp %318 : vector<8x4xf32>
    %322 = arith.mulf %260, %321 : vector<8x4xf32>
    %323 = vector.extract_strided_slice %320 {offsets = [0, 0], sizes = [8, 1], strides = [1, 1]} : vector<8x4xf32> to vector<8x1xf32>
    %324 = vector.shape_cast %323 : vector<8x1xf32> to vector<8x1xf32>
    %325 = vector.broadcast %324 : vector<8x1xf32> to vector<8x3xf32>
    %326 = vector.extract_strided_slice %320 {offsets = [0, 3], sizes = [8, 1], strides = [1, 1]} : vector<8x4xf32> to vector<8x1xf32>
    %327 = vector.shape_cast %326 : vector<8x1xf32> to vector<8x1xf32>
    %328 = vector.broadcast %327 : vector<8x1xf32> to vector<8x3xf32>
    %329 = tpu.concatenate %325, %320, %328 in 1 : vector<8x3xf32>, vector<8x4xf32>, vector<8x3xf32> -> vector<8x10xf32>
    %330 = vector.extract_strided_slice %329 {offsets = [0, 0], sizes = [8, 6], strides = [1, 1]} : vector<8x10xf32> to vector<8x6xf32>
    %331 = vector.extract_strided_slice %329 {offsets = [0, 1], sizes = [8, 6], strides = [1, 1]} : vector<8x10xf32> to vector<8x6xf32>
    %332 = vector.extract_strided_slice %329 {offsets = [0, 2], sizes = [8, 6], strides = [1, 1]} : vector<8x10xf32> to vector<8x6xf32>
    %333 = vector.extract_strided_slice %329 {offsets = [0, 3], sizes = [8, 6], strides = [1, 1]} : vector<8x10xf32> to vector<8x6xf32>
    %334 = vector.extract_strided_slice %329 {offsets = [0, 4], sizes = [8, 6], strides = [1, 1]} : vector<8x10xf32> to vector<8x6xf32>
    %335 = tpu.concatenate %330, %331, %332, %333, %334 in 0 : vector<8x6xf32>, vector<8x6xf32>, vector<8x6xf32>, vector<8x6xf32>, vector<8x6xf32> -> vector<40x6xf32>
    %336 = vector.extract_strided_slice %322 {offsets = [0, 0], sizes = [8, 1], strides = [1, 1]} : vector<8x4xf32> to vector<8x1xf32>
    %337 = vector.shape_cast %336 : vector<8x1xf32> to vector<8x1xf32>
    %338 = vector.broadcast %337 : vector<8x1xf32> to vector<8x3xf32>
    %339 = vector.extract_strided_slice %322 {offsets = [0, 3], sizes = [8, 1], strides = [1, 1]} : vector<8x4xf32> to vector<8x1xf32>
    %340 = vector.shape_cast %339 : vector<8x1xf32> to vector<8x1xf32>
    %341 = vector.broadcast %340 : vector<8x1xf32> to vector<8x3xf32>
    %342 = tpu.concatenate %338, %322, %341 in 1 : vector<8x3xf32>, vector<8x4xf32>, vector<8x3xf32> -> vector<8x10xf32>
    %343 = vector.extract_strided_slice %342 {offsets = [0, 0], sizes = [8, 6], strides = [1, 1]} : vector<8x10xf32> to vector<8x6xf32>
    %344 = vector.extract_strided_slice %342 {offsets = [0, 1], sizes = [8, 6], strides = [1, 1]} : vector<8x10xf32> to vector<8x6xf32>
    %345 = vector.extract_strided_slice %342 {offsets = [0, 2], sizes = [8, 6], strides = [1, 1]} : vector<8x10xf32> to vector<8x6xf32>
    %346 = vector.extract_strided_slice %342 {offsets = [0, 3], sizes = [8, 6], strides = [1, 1]} : vector<8x10xf32> to vector<8x6xf32>
    %347 = vector.extract_strided_slice %342 {offsets = [0, 4], sizes = [8, 6], strides = [1, 1]} : vector<8x10xf32> to vector<8x6xf32>
    %348 = tpu.concatenate %343, %344, %345, %346, %347 in 0 : vector<8x6xf32>, vector<8x6xf32>, vector<8x6xf32>, vector<8x6xf32>, vector<8x6xf32> -> vector<40x6xf32>
    %349 = tpu.concatenate %335, %348 in 0 : vector<40x6xf32>, vector<40x6xf32> -> vector<80x6xf32>
    %c2_101 = arith.constant 2 : index
    %c1_102 = arith.constant 1 : index
    %c0_103 = arith.constant 0 : index
    %c0_104 = arith.constant 0 : index
    %350 = vector.load %arg3[%c2_101, %c1_102, %c0_103, %c0_104] : memref<3x2x16x80xf32, #tpu.memory_space<vmem>>, vector<1x1x16x80xf32>
    %351 = vector.shape_cast %350 : vector<1x1x16x80xf32> to vector<16x80xf32>
    %cst_105 = arith.constant dense<0.000000e+00> : vector<16x6xf32>
    %352 = tpu.matmul %351, %349, %cst_105 {dimension_numbers = #tpu.dot_dimension_numbers<[1], [0], [0], [1], [0, 0, 1, 1], [], []>} : vector<16x80xf32>, vector<80x6xf32>, vector<16x6xf32> -> vector<16x6xf32>
    %c2_106 = arith.constant 2 : index
    %c1_107 = arith.constant 1 : index
    %c0_108 = arith.constant 0 : index
    %c0_109 = arith.constant 0 : index
    %353 = vector.load %arg4[%c2_106, %c1_107, %c0_108, %c0_109] : memref<3x2x16x1xf32, #tpu.memory_space<vmem>>, vector<1x1x16x1xf32>
    %354 = vector.shape_cast %353 : vector<1x1x16x1xf32> to vector<16x1xf32>
    %355 = vector.broadcast %354 : vector<16x1xf32> to vector<16x6xf32>
    %356 = arith.addf %352, %355 : vector<16x6xf32>
    %cst_110 = arith.constant 0.000000e+00 : f32
    %357 = vector.broadcast %cst_110 : f32 to vector<16x6xf32>
    %358 = arith.cmpf ogt, %356, %357 : vector<16x6xf32>
    %cst_111 = arith.constant 0.00999999977 : f32
    %359 = vector.broadcast %cst_111 : f32 to vector<16x6xf32>
    %360 = arith.mulf %359, %356 : vector<16x6xf32>
    %361 = arith.select %358, %356, %360 : vector<16x6xi1>, vector<16x6xf32>
    %c2_112 = arith.constant 2 : index
    %c1_113 = arith.constant 1 : index
    %c0_114 = arith.constant 0 : index
    %c0_115 = arith.constant 0 : index
    %362 = vector.load %arg5[%c2_112, %c1_113, %c0_114, %c0_115] : memref<3x2x16x48xf32, #tpu.memory_space<vmem>>, vector<1x1x16x48xf32>
    %363 = vector.shape_cast %362 : vector<1x1x16x48xf32> to vector<16x48xf32>
    %364 = vector.extract_strided_slice %361 {offsets = [0, 0], sizes = [16, 4], strides = [1, 1]} : vector<16x6xf32> to vector<16x4xf32>
    %365 = vector.extract_strided_slice %361 {offsets = [0, 1], sizes = [16, 4], strides = [1, 1]} : vector<16x6xf32> to vector<16x4xf32>
    %366 = vector.extract_strided_slice %361 {offsets = [0, 2], sizes = [16, 4], strides = [1, 1]} : vector<16x6xf32> to vector<16x4xf32>
    %367 = tpu.concatenate %364, %365, %366 in 0 : vector<16x4xf32>, vector<16x4xf32>, vector<16x4xf32> -> vector<48x4xf32>
    %cst_116 = arith.constant dense<0.000000e+00> : vector<16x4xf32>
    %368 = tpu.matmul %363, %367, %cst_116 {dimension_numbers = #tpu.dot_dimension_numbers<[1], [0], [0], [1], [0, 0, 1, 1], [], []>} : vector<16x48xf32>, vector<48x4xf32>, vector<16x4xf32> -> vector<16x4xf32>
    %c2_117 = arith.constant 2 : index
    %c1_118 = arith.constant 1 : index
    %c0_119 = arith.constant 0 : index
    %c0_120 = arith.constant 0 : index
    %369 = vector.load %arg6[%c2_117, %c1_118, %c0_119, %c0_120] : memref<3x2x16x1xf32, #tpu.memory_space<vmem>>, vector<1x1x16x1xf32>
    %370 = vector.shape_cast %369 : vector<1x1x16x1xf32> to vector<16x1xf32>
    %371 = vector.broadcast %370 : vector<16x1xf32> to vector<16x4xf32>
    %372 = arith.addf %368, %371 : vector<16x4xf32>
    %373 = math.tanh %372 : vector<16x4xf32>
    %374 = vector.extract_strided_slice %373 {offsets = [0, 0], sizes = [8, 4], strides = [1, 1]} : vector<16x4xf32> to vector<8x4xf32>
    %375 = vector.extract_strided_slice %373 {offsets = [8, 0], sizes = [8, 4], strides = [1, 1]} : vector<16x4xf32> to vector<8x4xf32>
    %376 = arith.addf %322, %374 : vector<8x4xf32>
    %377 = arith.subf %320, %375 : vector<8x4xf32>
    %378 = tpu.concatenate %3, %254, %255, %376, %377 in 1 : vector<8x16xf32>, vector<8x4xf32>, vector<8x4xf32>, vector<8x4xf32>, vector<8x4xf32> -> vector<8x32xf32>
    %c0_121 = arith.constant 0 : index
    %c0_122 = arith.constant 0 : index
    %379 = vector.load %arg7[%c0_121, %c0_122] : memref<32x8xf32, #tpu.memory_space<vmem>>, vector<32x8xf32>
    %cst_123 = arith.constant dense<0.000000e+00> : vector<8x8xf32>
    %380 = tpu.matmul %378, %379, %cst_123 {dimension_numbers = #tpu.dot_dimension_numbers<[1], [0], [0], [1], [0, 0, 1, 1], [], []>} : vector<8x32xf32>, vector<32x8xf32>, vector<8x8xf32> -> vector<8x8xf32>
    %c0_124 = arith.constant 0 : index
    %c0_125 = arith.constant 0 : index
    %c0_126 = arith.constant 0 : index
    %381 = vector.load %arg8[%c0_124, %c0_125, %c0_126] : memref<1x8x8xf32, #tpu.memory_space<vmem>>, vector<1x8x8xf32>
    %382 = vector.shape_cast %381 : vector<1x8x8xf32> to vector<8x8xf32>
    %383 = vector.shape_cast %380 : vector<8x8xf32> to vector<1x8x8xf32>
    tpu.vector_store %arg8[%c0_124, %c0_125, %c0_126], %383 {strides = array<i32>} : memref<1x8x8xf32, #tpu.memory_space<vmem>>, vector<1x8x8xf32>,
    return
  }
  func.func @transform_0(%arg0: i32) -> (i32, i32, i32) {
    %c0_i32 = arith.constant 0 : i32
    %c0_i32_0 = arith.constant 0 : i32
    %c0_i32_1 = arith.constant 0 : i32
    return %arg0, %c0_i32, %c0_i32_0 : i32, i32, i32
  }
  func.func @transform_1(%arg0: i32) -> (i32, i32) {
    %c0_i32 = arith.constant 0 : i32
    %c0_i32_0 = arith.constant 0 : i32
    %c0_i32_1 = arith.constant 0 : i32
    return %c0_i32, %c0_i32_0 : i32, i32
  }
  func.func @transform_2(%arg0: i32) -> (i32, i32, i32, i32) {
    %c0_i32 = arith.constant 0 : i32
    %c0_i32_0 = arith.constant 0 : i32
    %c0_i32_1 = arith.constant 0 : i32
    %c0_i32_2 = arith.constant 0 : i32
    %c0_i32_3 = arith.constant 0 : i32
    return %c0_i32, %c0_i32_0, %c0_i32_1, %c0_i32_2 : i32, i32, i32, i32
  }
  func.func @transform_3(%arg0: i32) -> (i32, i32, i32, i32) {
    %c0_i32 = arith.constant 0 : i32
    %c0_i32_0 = arith.constant 0 : i32
    %c0_i32_1 = arith.constant 0 : i32
    %c0_i32_2 = arith.constant 0 : i32
    %c0_i32_3 = arith.constant 0 : i32
    return %c0_i32, %c0_i32_0, %c0_i32_1, %c0_i32_2 : i32, i32, i32, i32
  }
  func.func @transform_4(%arg0: i32) -> (i32, i32, i32, i32) {
    %c0_i32 = arith.constant 0 : i32
    %c0_i32_0 = arith.constant 0 : i32
    %c0_i32_1 = arith.constant 0 : i32
    %c0_i32_2 = arith.constant 0 : i32
    %c0_i32_3 = arith.constant 0 : i32
    return %c0_i32, %c0_i32_0, %c0_i32_1, %c0_i32_2 : i32, i32, i32, i32
  }
  func.func @transform_5(%arg0: i32) -> (i32, i32, i32, i32) {
    %c0_i32 = arith.constant 0 : i32
    %c0_i32_0 = arith.constant 0 : i32
    %c0_i32_1 = arith.constant 0 : i32
    %c0_i32_2 = arith.constant 0 : i32
    %c0_i32_3 = arith.constant 0 : i32
    return %c0_i32, %c0_i32_0, %c0_i32_1, %c0_i32_2 : i32, i32, i32, i32
  }
  func.func @transform_6(%arg0: i32) -> (i32, i32) {
    %c0_i32 = arith.constant 0 : i32
    %c0_i32_0 = arith.constant 0 : i32
    %c0_i32_1 = arith.constant 0 : i32
    return %c0_i32, %c0_i32_0 : i32, i32
  }
  func.func @transform_7(%arg0: i32) -> (i32, i32, i32) {
    %c0_i32 = arith.constant 0 : i32
    %c0_i32_0 = arith.constant 0 : i32
    %c0_i32_1 = arith.constant 0 : i32
    return %arg0, %c0_i32, %c0_i32_0 : i32, i32, i32
  }
}

</mosaic_0001>

<llo_original>
// kernel: model_forward_pallas.1
$region0: #{model_forward_pallas.1}
  #allocation0 [shape = 'u32[]', space=smem, size = 0x4, offset = 0x4, fixed_abs, tag = 'smem constant byte address 0x4 - core index']
  #allocation1 [shape = 'u32[144,128]{1,0:T(1,128)}', space=vmem, size = 0x12000, scoped, tag = 'internal scratch']
  %s0 = inlined_call_operand.vmem [shape: f32[2,8,16], index: 0, kind: input, shape index: {}]
  %s1 = inlined_call_operand.vmem [shape: f32[8,16], index: 1, kind: input, shape index: {}]
  %s2 = inlined_call_operand.vmem [shape: f32[3,2,16,80], index: 2, kind: input, shape index: {}]
  %s3 = inlined_call_operand.vmem [shape: f32[3,2,16,1], index: 3, kind: input, shape index: {}]
  %s4 = inlined_call_operand.vmem [shape: f32[3,2,16,48], index: 4, kind: input, shape index: {}]
  %s5 = inlined_call_operand.vmem [shape: f32[3,2,16,1], index: 5, kind: input, shape index: {}]
  %s6 = inlined_call_operand.vmem [shape: f32[32,8], index: 6, kind: input, shape index: {}]
  %s7 = inlined_call_operand.vmem [shape: f32[2,8,8], index: 7, kind: output, shape index: {}]
  %s8 = sld [smem:[#allocation0]]
  $region61: #{model_forward_pallas.1} parent=0
    _
  %s10 = ssub.s32 1, %s8
  %s11 = scalar_select 0, %s10, %s8
  loop: start=0, step=1, limit=4
  $region2: #{model_forward_pallas.1} parent=0 // loop_pre_header
    _
  $region3: #{model_forward_pallas.1} parent=0 // loop_header
    %s13 = sphi 0, %s17
    %p14 = scmp.ge.s32.totalorder %s13, 4
    %s23 = sphi 0, %s25
    %s26 = sphi 0, %s23
    %s27 = sphi 0, %s26
    %s43 = sphi 0, %s27
    %s47 = sphi 0, %s47
    %s49 = sphi 0, %s47
    %s50 = sphi 0, %s49
    %s64 = sphi 0, %s50
    %s68 = sphi 0, %s68
    %s70 = sphi 0, %s68
    %s71 = sphi 0, %s70
    %s85 = sphi 0, %s71
    %s89 = sphi 0, %s89
    %s91 = sphi 0, %s89
    %s92 = sphi 0, %s91
    %s106 = sphi 0, %s92
    %s110 = sphi 0, %s110
    %s112 = sphi 0, %s110
    %s113 = sphi 0, %s112
    %s127 = sphi 0, %s113
    %s131 = sphi 0, %s131
    %s133 = sphi 0, %s131
    %s134 = sphi 0, %s133
    %s148 = sphi 0, %s134
    %s152 = sphi 0, %s152
    %s154 = sphi 0, %s152
    %s155 = sphi 0, %s154
    %s169 = sphi 0, %s155
    %s175 = sphi 0, %s177
    %s178 = sphi 0, %s175
    %s179 = sphi 0, %s178
    %s195 = sphi 0, %s179
  $region4: #{model_forward_pallas.1} parent=0 // loop_header_branch
    %16 = sbr.rel (%p14) target = $region8
  $region5: #{model_forward_pallas.1} parent=0 // loop_body
    %s18 = ssub.s32 %s13, 1
    %s19 = ssub.s32 %s13, 2
    %s20 = sadd.s32 %s13, 1
    %s21 = ssub.s32 %s13, %s20
    %p22 = scmp.eq.s32.totalorder %s21, 0
    %s24 = sadd.s32 %s23, 1
    %s25 = scalar_select %p22, %s23, %s24
    %p28 = pneg %p22
    %p29 = scmp.eq.s32.totalorder %s13, 1
    %p30 = por %p28, %p29
    %p31 = scmp.ne.s32.totalorder %s23, %s26
    %p32 = scmp.eq.s32.totalorder %s13, 0
    %p33 = por %p31, %p32
    %p34 = scmp.ne.s32.totalorder %s23, %s26
    %p35 = scmp.eq.s32.totalorder %s18, 1
    %p36 = por %p34, %p35
    %p37 = scmp.ne.s32.totalorder %s26, %s27
    %p38 = scmp.eq.s32.totalorder %s18, 0
    %p39 = por %p37, %p38
    %p40 = scmp.ne.s32.totalorder %s26, %s27
    %p41 = scmp.eq.s32.totalorder %s19, 1
    %p42 = por %p40, %p41
    %p44 = scmp.ne.s32.totalorder %s27, %s43
    %p45 = scmp.eq.s32.totalorder %s19, 0
    %p46 = por %p44, %p45
    %s48 = sadd.s32 %s47, 1
    %p51 = scmp.eq.s32.totalorder %s13, 1
    %p52 = scmp.ne.s32.totalorder %s47, %s49
    %p53 = scmp.eq.s32.totalorder %s13, 0
    %p54 = por %p52, %p53
    %p55 = scmp.ne.s32.totalorder %s47, %s49
    %p56 = scmp.eq.s32.totalorder %s18, 1
    %p57 = por %p55, %p56
    %p58 = scmp.ne.s32.totalorder %s49, %s50
    %p59 = scmp.eq.s32.totalorder %s18, 0
    %p60 = por %p58, %p59
    %p61 = scmp.ne.s32.totalorder %s49, %s50
    %p62 = scmp.eq.s32.totalorder %s19, 1
    %p63 = por %p61, %p62
    %p65 = scmp.ne.s32.totalorder %s50, %s64
    %p66 = scmp.eq.s32.totalorder %s19, 0
    %p67 = por %p65, %p66
    %s69 = sadd.s32 %s68, 1
    %p72 = scmp.eq.s32.totalorder %s13, 1
    %p73 = scmp.ne.s32.totalorder %s68, %s70
    %p74 = scmp.eq.s32.totalorder %s13, 0
    %p75 = por %p73, %p74
    %p76 = scmp.ne.s32.totalorder %s68, %s70
    %p77 = scmp.eq.s32.totalorder %s18, 1
    %p78 = por %p76, %p77
    %p79 = scmp.ne.s32.totalorder %s70, %s71
    %p80 = scmp.eq.s32.totalorder %s18, 0
    %p81 = por %p79, %p80
    %p82 = scmp.ne.s32.totalorder %s70, %s71
    %p83 = scmp.eq.s32.totalorder %s19, 1
    %p84 = por %p82, %p83
    %p86 = scmp.ne.s32.totalorder %s71, %s85
    %p87 = scmp.eq.s32.totalorder %s19, 0
    %p88 = por %p86, %p87
    %s90 = sadd.s32 %s89, 1
    %p93 = scmp.eq.s32.totalorder %s13, 1
    %p94 = scmp.ne.s32.totalorder %s89, %s91
    %p95 = scmp.eq.s32.totalorder %s13, 0
    %p96 = por %p94, %p95
    %p97 = scmp.ne.s32.totalorder %s89, %s91
    %p98 = scmp.eq.s32.totalorder %s18, 1
    %p99 = por %p97, %p98
    %p100 = scmp.ne.s32.totalorder %s91, %s92
    %p101 = scmp.eq.s32.totalorder %s18, 0
    %p102 = por %p100, %p101
    %p103 = scmp.ne.s32.totalorder %s91, %s92
    %p104 = scmp.eq.s32.totalorder %s19, 1
    %p105 = por %p103, %p104
    %p107 = scmp.ne.s32.totalorder %s92, %s106
    %p108 = scmp.eq.s32.totalorder %s19, 0
    %p109 = por %p107, %p108
    %s111 = sadd.s32 %s110, 1
    %p114 = scmp.eq.s32.totalorder %s13, 1
    %p115 = scmp.ne.s32.totalorder %s110, %s112
    %p116 = scmp.eq.s32.totalorder %s13, 0
    %p117 = por %p115, %p116
    %p118 = scmp.ne.s32.totalorder %s110, %s112
    %p119 = scmp.eq.s32.totalorder %s18, 1
    %p120 = por %p118, %p119
    %p121 = scmp.ne.s32.totalorder %s112, %s113
    %p122 = scmp.eq.s32.totalorder %s18, 0
    %p123 = por %p121, %p122
    %p124 = scmp.ne.s32.totalorder %s112, %s113
    %p125 = scmp.eq.s32.totalorder %s19, 1
    %p126 = por %p124, %p125
    %p128 = scmp.ne.s32.totalorder %s113, %s127
    %p129 = scmp.eq.s32.totalorder %s19, 0
    %p130 = por %p128, %p129
    %s132 = sadd.s32 %s131, 1
    %p135 = scmp.eq.s32.totalorder %s13, 1
    %p136 = scmp.ne.s32.totalorder %s131, %s133
    %p137 = scmp.eq.s32.totalorder %s13, 0
    %p138 = por %p136, %p137
    %p139 = scmp.ne.s32.totalorder %s131, %s133
    %p140 = scmp.eq.s32.totalorder %s18, 1
    %p141 = por %p139, %p140
    %p142 = scmp.ne.s32.totalorder %s133, %s134
    %p143 = scmp.eq.s32.totalorder %s18, 0
    %p144 = por %p142, %p143
    %p145 = scmp.ne.s32.totalorder %s133, %s134
    %p146 = scmp.eq.s32.totalorder %s19, 1
    %p147 = por %p145, %p146
    %p149 = scmp.ne.s32.totalorder %s134, %s148
    %p150 = scmp.eq.s32.totalorder %s19, 0
    %p151 = por %p149, %p150
    %s153 = sadd.s32 %s152, 1
    %p156 = scmp.eq.s32.totalorder %s13, 1
    %p157 = scmp.ne.s32.totalorder %s152, %s154
    %p158 = scmp.eq.s32.totalorder %s13, 0
    %p159 = por %p157, %p158
    %p160 = scmp.ne.s32.totalorder %s152, %s154
    %p161 = scmp.eq.s32.totalorder %s18, 1
    %p162 = por %p160, %p161
    %p163 = scmp.ne.s32.totalorder %s154, %s155
    %p164 = scmp.eq.s32.totalorder %s18, 0
    %p165 = por %p163, %p164
    %p166 = scmp.ne.s32.totalorder %s154, %s155
    %p167 = scmp.eq.s32.totalorder %s19, 1
    %p168 = por %p166, %p167
    %p170 = scmp.ne.s32.totalorder %s155, %s169
    %p171 = scmp.eq.s32.totalorder %s19, 0
    %p172 = por %p170, %p171
    %s173 = ssub.s32 %s13, %s20
    %p174 = scmp.eq.s32.totalorder %s173, 0
    %s176 = sadd.s32 %s175, 1
    %s177 = scalar_select %p174, %s175, %s176
    %p180 = pneg %p174
    %p181 = scmp.eq.s32.totalorder %s13, 1
    %p182 = por %p180, %p181
    %p183 = scmp.ne.s32.totalorder %s175, %s178
    %p184 = scmp.eq.s32.totalorder %s13, 0
    %p185 = por %p183, %p184
    %p186 = scmp.ne.s32.totalorder %s175, %s178
    %p187 = scmp.eq.s32.totalorder %s18, 1
    %p188 = por %p186, %p187
    %p189 = scmp.ne.s32.totalorder %s178, %s179
    %p190 = scmp.eq.s32.totalorder %s18, 0
    %p191 = por %p189, %p190
    %p192 = scmp.ne.s32.totalorder %s178, %s179
    %p193 = scmp.eq.s32.totalorder %s19, 1
    %p194 = por %p192, %p193
    %p196 = scmp.ne.s32.totalorder %s179, %s195
    %p197 = scmp.eq.s32.totalorder %s19, 0
    %p198 = por %p196, %p197
    %p199 = scmp.le.s32.totalorder 1, %s13
    %p200 = scmp.lt.s32.totalorder %s13, 3
    %p201 = pnand %p199, %p200
    %p202 = pneg %p201
    // Predicated region
    $region9: #{model_forward_pallas.1} parent=5 // pred_check
      _
    $region10: #{model_forward_pallas.1} parent=5 // pred_check_branch
      %204 = sbr.rel (%p201) target = $region12
    $region11: #{model_forward_pallas.1} parent=5 // pred_region
      %s205 = ssub.s32 %s13, 1
      // Predicated region
      $region13: #{model_forward_pallas.1} parent=11 // pred_check
        %p206 = pneg %p60
      $region14: #{model_forward_pallas.1} parent=11 // pred_check_branch
        %208 = sbr.rel (%p206) target = $region16
      $region15: #{model_forward_pallas.1} parent=11 // pred_region
        _
      $region16: #{model_forward_pallas.1} parent=11 // pred_fallthru
        _
      // Predicated region
      $region17: #{model_forward_pallas.1} parent=11 // pred_check
        %p209 = pneg %p81
      $region18: #{model_forward_pallas.1} parent=11 // pred_check_branch
        %211 = sbr.rel (%p209) target = $region20
      $region19: #{model_forward_pallas.1} parent=11 // pred_region
        _
      $region20: #{model_forward_pallas.1} parent=11 // pred_fallthru
        _
      // Predicated region
      $region21: #{model_forward_pallas.1} parent=11 // pred_check
        %p212 = pneg %p102
      $region22: #{model_forward_pallas.1} parent=11 // pred_check_branch
        %214 = sbr.rel (%p212) target = $region24
      $region23: #{model_forward_pallas.1} parent=11 // pred_region
        _
      $region24: #{model_forward_pallas.1} parent=11 // pred_fallthru
        _
      // Predicated region
      $region25: #{model_forward_pallas.1} parent=11 // pred_check
        %p215 = pneg %p123
      $region26: #{model_forward_pallas.1} parent=11 // pred_check_branch
        %217 = sbr.rel (%p215) target = $region28
      $region27: #{model_forward_pallas.1} parent=11 // pred_region
        _
      $region28: #{model_forward_pallas.1} parent=11 // pred_fallthru
        _
      // Predicated region
      $region29: #{model_forward_pallas.1} parent=11 // pred_check
        %p218 = pneg %p144
      $region30: #{model_forward_pallas.1} parent=11 // pred_check_branch
        %220 = sbr.rel (%p218) target = $region32
      $region31: #{model_forward_pallas.1} parent=11 // pred_region
        _
      $region32: #{model_forward_pallas.1} parent=11 // pred_fallthru
        _
      // Predicated region
      $region33: #{model_forward_pallas.1} parent=11 // pred_check
        %p221 = pneg %p165
      $region34: #{model_forward_pallas.1} parent=11 // pred_check_branch
        %223 = sbr.rel (%p221) target = $region36
      $region35: #{model_forward_pallas.1} parent=11 // pred_region
        _
      $region36: #{model_forward_pallas.1} parent=11 // pred_fallthru
        _
    $region12: #{model_forward_pallas.1} parent=5 // pred_fallthru
      _
    %p224 = scmp.lt.s32.totalorder %s13, 2
    // Predicated region
    $region37: #{model_forward_pallas.1} parent=5 // pred_check
      %p225 = pneg %p224
    $region38: #{model_forward_pallas.1} parent=5 // pred_check_branch
      %227 = sbr.rel (%p225) target = $region40
    $region39: #{model_forward_pallas.1} parent=5 // pred_region
      // Predicated region
      $region41: #{model_forward_pallas.1} parent=39 // pred_check
        %p228 = pneg %p33
      $region42: #{model_forward_pallas.1} parent=39 // pred_check_branch
        %230 = sbr.rel (%p228) target = $region44
      $region43: #{model_forward_pallas.1} parent=39 // pred_region
        %p231 = scmp.lt.s32.totalorder %s13, 1
        %s232 = scalar_select %p231, %s13, 1
        %s233 = smul.addr %s232, 8
        %s234 = scalar_lea.vmem %s0, %s233
      $region44: #{model_forward_pallas.1} parent=39 // pred_fallthru
        _
    $region40: #{model_forward_pallas.1} parent=5 // pred_fallthru
      _
    %p235 = scmp.le.s32.totalorder 1, %s13
    %p236 = scmp.lt.s32.totalorder %s13, 3
    %p237 = pnand %p235, %p236
    %p238 = pneg %p237
    // Predicated region
    $region45: #{model_forward_pallas.1} parent=5 // pred_check
      _
    $region46: #{model_forward_pallas.1} parent=5 // pred_check_branch
      %240 = sbr.rel (%p237) target = $region48
    $region47: #{model_forward_pallas.1} parent=5 // pred_region
      %s241 = ssub.s32 %s13, 1
      %p242 = scmp.lt.s32.totalorder %s18, 1
      %s243 = scalar_select %p242, %s18, 1
      %s244 = smul.addr %s243, 8
      %s245 = scalar_lea.vmem %s0, %s244
      %p246 = pneg %p39
      %p247 = pneg %p36
      %p248 = pneg %p60
      %p249 = pneg %p57
      %p250 = pneg %p81
      %p251 = pneg %p78
      %p252 = pneg %p102
      %p253 = pneg %p99
      %p254 = pneg %p123
      %p255 = pneg %p120
      %p256 = pneg %p144
      %p257 = pneg %p141
      %p258 = pneg %p165
      %p259 = pneg %p162
      %p260 = pneg %p191
      %p261 = pneg %p188
      %p262 = scmp.lt.s32.totalorder %s18, 1
      %s263 = scalar_select %p262, %s18, 1
      %s264 = smul.addr %s263, 8
      %s265 = scalar_lea.vmem %s7, %s264
      %p266 = scmp.lt.s32.totalorder %s18, 1
      %s267 = scalar_select %p266, %s18, 1
      %s268 = smul.addr %s267, 8
      %s269 = scalar_lea.vmem %s0, %s268
      %p270 = scmp.lt.s32.totalorder %s18, 1
      %s271 = scalar_select %p270, %s18, 1
      %s272 = smul.addr %s271, 8
      %s273 = scalar_lea.vmem %s7, %s272
      %v274 = vld [vmem:[%s269] sm:$0xff]
      %v275 = vld [vmem:[%s1] sm:$0xff]
      %v276 = vadd.f32 %v274, %v275
      %278 = vrot.lane.b32.xlu0 %v276, 127
      %v279 = vpop.permute.xlu0 %278
      %281 = vrot.lane.b32.xlu0 %v276, 126
      %v282 = vpop.permute.xlu0 %281
      %284 = vrot.lane.b32.xlu0 %v276, 125
      %v285 = vpop.permute.xlu0 %284
      %287 = vrot.lane.b32.xlu0 %v276, 124
      %v288 = vpop.permute.xlu0 %287
      %290 = vrot.lane.b32.xlu0 %v276, 123
      %v291 = vpop.permute.xlu0 %290
      %293 = vrot.lane.b32.xlu0 %v276, 122
      %v294 = vpop.permute.xlu0 %293
      %296 = vrot.lane.b32.xlu0 %v276, 121
      %v297 = vpop.permute.xlu0 %296
      %vm299 = vcmask 7168
      %v300 = vsel %vm299, %v276, %v279
      %vm301 = vcmask 15360
      %v302 = vsel %vm301, %v300, %v282
      %vm303 = vcmask 23552
      %v304 = vsel %vm303, %v302, %v285
      %vm305 = vcmask 31744
      %v306 = vsel %vm305, %v304, %v288
      %vm307 = vcmask 39936
      %v308 = vsel %vm307, %v306, %v291
      %vm309 = vcmask 48128
      %v310 = vsel %vm309, %v308, %v294
      %vm311 = vcmask 56320
      %v312 = vsel %vm311, %v310, %v297
      %313 = vrot.lane.b32.xlu0 %v276, 120
      %v314 = vpop.permute.xlu0 %313
      %v316 = vsel %vm299, %v279, %v282
      %v317 = vsel %vm301, %v316, %v285
      %v318 = vsel %vm303, %v317, %v288
      %v319 = vsel %vm305, %v318, %v291
      %v320 = vsel %vm307, %v319, %v294
      %v321 = vsel %vm309, %v320, %v297
      %v322 = vsel %vm311, %v321, %v314
      %324 = vset.pattern.permute.xlu0 0
      %325 = vperm.xlu0 %324, %v312
      %v326 = vpop.permute.xlu0 %325
      %328 = vset.pattern.permute.xlu0 7
      %329 = vperm.xlu0 %328, %v312
      %v330 = vpop.permute.xlu0 %329
      %332 = vrot.lane.b32.xlu0 %v312, 3
      %v333 = vpop.permute.xlu0 %332
      %v335 = vsel %vm303, %v326, %v333
      %vm336 = vcmask 89088
      %v337 = vsel %vm336, %v335, %v330
      %339 = vrot.lane.b32.xlu0 %v337, 127
      %v340 = vpop.permute.xlu0 %339
      %342 = vrot.lane.b32.xlu0 %v337, 126
      %v343 = vpop.permute.xlu0 %342
      %345 = vrot.lane.b32.xlu0 %v337, 125
      %v346 = vpop.permute.xlu0 %345
      %348 = vrot.lane.b32.xlu0 %v337, 124
      %v349 = vpop.permute.xlu0 %348
      %352 = vset.pattern.permute.xlu0 0
      %353 = vperm.xlu0 %352, %v322
      %v354 = vpop.permute.xlu0 %353
      %356 = vset.pattern.permute.xlu0 7
      %357 = vperm.xlu0 %356, %v322
      %v358 = vpop.permute.xlu0 %357
      %360 = vrot.lane.b32.xlu0 %v322, 3
      %v361 = vpop.permute.xlu0 %360
      %v363 = vsel %vm303, %v354, %v361
      %v364 = vsel %vm336, %v363, %v358
      %366 = vrot.lane.b32.xlu0 %v364, 127
      %v367 = vpop.permute.xlu0 %366
      %369 = vrot.lane.b32.xlu0 %v364, 126
      %v370 = vpop.permute.xlu0 %369
      %372 = vrot.lane.b32.xlu0 %v364, 125
      %v373 = vpop.permute.xlu0 %372
      %375 = vrot.lane.b32.xlu0 %v364, 124
      %v376 = vpop.permute.xlu0 %375
      %v378 = vld [vmem:[%s2] sm:$0xff]
      %v379 = vld [vmem:[%s2 + $0x8] sm:$0xff]
      %v380 = vld [vmem:[%s3] sm:$0xff]
      %v381 = vld [vmem:[%s3 + $0x8] sm:$0xff]
      %383 = vset.pattern.permute.xlu0 0
      %384 = vperm.xlu0 %383, %v380
      %v385 = vpop.permute.xlu0 %384
      %388 = vset.pattern.permute.xlu0 0
      %389 = vperm.xlu0 %388, %v381
      %v390 = vpop.permute.xlu0 %389
      %vm392 = vcmask 654336
      %v394 = vsel %vm392, %v378, 0
      %v397 = vsel %vm392, %v379, 0
      %399 = vmatprep.subr.mxu0 0.0
      %400 = vmatpush1.msra.mxu0 %v337
      %401 = vmatprep.subr.mxu0 0.0
      %402 = vmatpush1.msra.mxu0 %v340
      %403 = vmatprep.subr.mxu0 0.0
      %404 = vmatpush1.msra.mxu0 %v343
      %405 = vmatprep.subr.mxu0 0.0
      %406 = vmatpush1.msra.mxu0 %v346
      %407 = vmatprep.subr.mxu0 0.0
      %408 = vmatpush1.msra.mxu0 %v349
      %409 = vmatprep.subr.mxu0 0.0
      %410 = vmatpush1.msra.mxu0 %v364
      %411 = vmatprep.subr.mxu0 0.0
      %412 = vmatpush1.msra.mxu0 %v367
      %413 = vmatprep.subr.mxu0 0.0
      %414 = vmatpush1.msra.mxu0 %v370
      %415 = vmatprep.subr.mxu0 0.0
      %416 = vmatpush1.msra.mxu0 %v373
      %417 = vmatprep.subr.mxu0 0.0
      %418 = vmatpush1.msra.mxu0 %v376
      %419 = vmatprep.subr.mxu0 0.0
      %420 = vmatpush1.msra.mxu0 0.0
      %421 = vmatprep.subr.mxu0 0.0
      %422 = vmatpush1.msra.mxu0 0.0
      %423 = vmatprep.subr.mxu0 0.0
      %424 = vmatpush1.msra.mxu0 0.0
      %425 = vmatprep.subr.mxu0 0.0
      %426 = vmatpush1.msra.mxu0 0.0
      %427 = vmatprep.subr.mxu0 0.0
      %428 = vmatpush1.msra.mxu0 0.0
      %429 = vmatprep.subr.mxu0 0.0
      %430 = vmatpush1.msra.mxu0 0.0
      %431 = vmatprep.subr.mxu0 0.0
      %432 = vmatpush1.msra.mxu0 0.0
      %433 = vmatprep.subr.mxu0 0.0
      %434 = vmatpush1.msra.mxu0 0.0
      %435 = vmatprep.subr.mxu0 0.0
      %436 = vmatpush1.msra.mxu0 0.0
      %437 = vmatprep.subr.mxu0 0.0
      %438 = vmatpush1.msra.mxu0 0.0
      %439 = vmatprep.subr.mxu0 0.0
      %440 = vmatpush1.msra.mxu0 0.0
      %441 = vmatprep.subr.mxu0 0.0
      %442 = vmatpush1.msra.mxu0 0.0
      %443 = vmatprep.subr.mxu0 0.0
      %444 = vmatpush1.msra.mxu0 0.0
      %445 = vmatprep.subr.mxu0 0.0
      %446 = vmatpush1.msra.mxu0 0.0
      %447 = vmatprep.subr.mxu0 0.0
      %448 = vmatpush1.msra.mxu0 0.0
      %449 = vmatprep.subr.mxu0 0.0
      %450 = vmatpush1.msra.mxu0 0.0
      %451 = vmatprep.subr.mxu0 0.0
      %452 = vmatpush1.msra.mxu0 0.0
      %453 = vmatprep.subr.mxu0 0.0
      %454 = vmatpush1.msra.mxu0 0.0
      %455 = vmatprep.subr.mxu0 0.0
      %456 = vmatpush1.msra.mxu0 0.0
      %457 = vmatprep.subr.mxu0 0.0
      %458 = vmatpush1.msra.mxu0 0.0
      %459 = vmatprep.subr.mxu0 0.0
      %460 = vmatpush1.msra.mxu0 0.0
      %461 = vmatprep.subr.mxu0 0.0
      %462 = vmatpush1.msra.mxu0 0.0
      %463 = vmatprep.mubr.f32.mxu0 0.0
      %464 = vmatmul.mubr.f32.gmra.mrb[0].mxu0 %v394
      %v465 = vpop.f32.mrb[0].mxu0
      %v466 = vadd.f32 %v385, %v465
      %v467 = vpop.f32.mrb[0].mxu0
      %468 = vmatprep.mubr.f32.mxu0 0.0
      %469 = vmatmul.mubr.f32.gmra.mrb[0].mxu0 %v397
      %v470 = vpop.f32.mrb[0].mxu0
      %v471 = vadd.f32 %v390, %v470
      %v472 = vpop.f32.mrb[0].mxu0
      %473 = vdwg.mxu0
      %vm474 = vcmp.gt.f32.partialorder %v466, 0.0
      %vm475 = vcmp.gt.f32.partialorder %v471, 0.0
      %v476 = vmul.f32 %v466, 0.01
      %v477 = vmul.f32 %v471, 0.01
      %v478 = vsel %vm474, %v466, %v476
      %v479 = vsel %vm475, %v471, %v477
      %v480 = vld [vmem:[%s4] sm:$0xff]
      %v481 = vld [vmem:[%s4 + $0x8] sm:$0xff]
      %484 = vrot.lane.b32.xlu0 %v478, 127
      %v485 = vpop.permute.xlu0 %484
      %486 = vrot.lane.b32.xlu0 %v479, 127
      %v487 = vpop.permute.xlu0 %486
      %490 = vrot.lane.b32.xlu0 %v478, 126
      %v491 = vpop.permute.xlu0 %490
      %492 = vrot.lane.b32.xlu0 %v479, 126
      %v493 = vpop.permute.xlu0 %492
      %v496 = vld [vmem:[%s5] sm:$0xff]
      %v497 = vld [vmem:[%s5 + $0x8] sm:$0xff]
      %499 = vset.pattern.permute.xlu0 0
      %500 = vperm.xlu0 %499, %v496
      %v501 = vpop.permute.xlu0 %500
      %504 = vset.pattern.permute.xlu0 0
      %505 = vperm.xlu0 %504, %v497
      %v506 = vpop.permute.xlu0 %505
      %vm508 = vcmask 392192
      %v510 = vsel %vm508, %v480, 0
      %v513 = vsel %vm508, %v481, 0
      %515 = vmatprep.subr.mxu0 0.0
      %516 = vmatpush1.msra.mxu0 %v478
      %517 = vmatprep.subr.mxu0 0.0
      %518 = vmatpush1.msra.mxu0 %v479
      %519 = vmatprep.subr.mxu0 0.0
      %520 = vmatpush1.msra.mxu0 %v485
      %521 = vmatprep.subr.mxu0 0.0
      %522 = vmatpush1.msra.mxu0 %v487
      %523 = vmatprep.subr.mxu0 0.0
      %524 = vmatpush1.msra.mxu0 %v491
      %525 = vmatprep.subr.mxu0 0.0
      %526 = vmatpush1.msra.mxu0 %v493
      %527 = vmatprep.subr.mxu0 0.0
      %528 = vmatpush1.msra.mxu0 0.0
      %529 = vmatprep.subr.mxu0 0.0
      %530 = vmatpush1.msra.mxu0 0.0
      %531 = vmatprep.subr.mxu0 0.0
      %532 = vmatpush1.msra.mxu0 0.0
      %533 = vmatprep.subr.mxu0 0.0
      %534 = vmatpush1.msra.mxu0 0.0
      %535 = vmatprep.subr.mxu0 0.0
      %536 = vmatpush1.msra.mxu0 0.0
      %537 = vmatprep.subr.mxu0 0.0
      %538 = vmatpush1.msra.mxu0 0.0
      %539 = vmatprep.subr.mxu0 0.0
      %540 = vmatpush1.msra.mxu0 0.0
      %541 = vmatprep.subr.mxu0 0.0
      %542 = vmatpush1.msra.mxu0 0.0
      %543 = vmatprep.subr.mxu0 0.0
      %544 = vmatpush1.msra.mxu0 0.0
      %545 = vmatprep.subr.mxu0 0.0
      %546 = vmatpush1.msra.mxu0 0.0
      %547 = vmatprep.subr.mxu0 0.0
      %548 = vmatpush1.msra.mxu0 0.0
      %549 = vmatprep.subr.mxu0 0.0
      %550 = vmatpush1.msra.mxu0 0.0
      %551 = vmatprep.subr.mxu0 0.0
      %552 = vmatpush1.msra.mxu0 0.0
      %553 = vmatprep.subr.mxu0 0.0
      %554 = vmatpush1.msra.mxu0 0.0
      %555 = vmatprep.subr.mxu0 0.0
      %556 = vmatpush1.msra.mxu0 0.0
      %557 = vmatprep.subr.mxu0 0.0
      %558 = vmatpush1.msra.mxu0 0.0
      %559 = vmatprep.subr.mxu0 0.0
      %560 = vmatpush1.msra.mxu0 0.0
      %561 = vmatprep.subr.mxu0 0.0
      %562 = vmatpush1.msra.mxu0 0.0
      %563 = vmatprep.subr.mxu0 0.0
      %564 = vmatpush1.msra.mxu0 0.0
      %565 = vmatprep.subr.mxu0 0.0
      %566 = vmatpush1.msra.mxu0 0.0
      %567 = vmatprep.subr.mxu0 0.0
      %568 = vmatpush1.msra.mxu0 0.0
      %569 = vmatprep.subr.mxu0 0.0
      %570 = vmatpush1.msra.mxu0 0.0
      %571 = vmatprep.subr.mxu0 0.0
      %572 = vmatpush1.msra.mxu0 0.0
      %573 = vmatprep.subr.mxu0 0.0
      %574 = vmatpush1.msra.mxu0 0.0
      %575 = vmatprep.subr.mxu0 0.0
      %576 = vmatpush1.msra.mxu0 0.0
      %577 = vmatprep.subr.mxu0 0.0
      %578 = vmatpush1.msra.mxu0 0.0
      %579 = vmatprep.mubr.f32.mxu0 0.0
      %580 = vmatmul.mubr.f32.gmra.mrb[0].mxu0 %v510
      %v581 = vpop.f32.mrb[0].mxu0
      %v582 = vadd.f32 %v501, %v581
      %v583 = vpop.f32.mrb[0].mxu0
      %584 = vmatprep.mubr.f32.mxu0 0.0
      %585 = vmatmul.mubr.f32.gmra.mrb[0].mxu0 %v513
      %v586 = vpop.f32.mrb[0].mxu0
      %v587 = vadd.f32 %v506, %v586
      %v588 = vpop.f32.mrb[0].mxu0
      %589 = vdwg.mxu0
      %v590 = vtanh.pop %v582
      %v591 = vtanh.pop %v587
      %v592 = vmul.f32 %v590, 1.442695
      %v593 = vpow.pop %v592
      %v594 = vmul.f32 %v322, %v593
      %v595 = vmul.f32 %v591, 1.442695
      %v596 = vpow.pop %v595
      %v597 = vmul.f32 %v312, %v596
      %599 = vset.pattern.permute.xlu0 0
      %600 = vperm.xlu0 %599, %v594
      %v601 = vpop.permute.xlu0 %600
      %603 = vset.pattern.permute.xlu0 7
      %604 = vperm.xlu0 %603, %v594
      %v605 = vpop.permute.xlu0 %604
      %607 = vrot.lane.b32.xlu0 %v594, 3
      %v608 = vpop.permute.xlu0 %607
      %v610 = vsel %vm303, %v601, %v608
      %v611 = vsel %vm336, %v610, %v605
      %613 = vrot.lane.b32.xlu0 %v611, 127
      %v614 = vpop.permute.xlu0 %613
      %616 = vrot.lane.b32.xlu0 %v611, 126
      %v617 = vpop.permute.xlu0 %616
      %619 = vrot.lane.b32.xlu0 %v611, 125
      %v620 = vpop.permute.xlu0 %619
      %622 = vrot.lane.b32.xlu0 %v611, 124
      %v623 = vpop.permute.xlu0 %622
      %626 = vset.pattern.permute.xlu0 0
      %627 = vperm.xlu0 %626, %v597
      %v628 = vpop.permute.xlu0 %627
      %630 = vset.pattern.permute.xlu0 7
      %631 = vperm.xlu0 %630, %v597
      %v632 = vpop.permute.xlu0 %631
      %634 = vrot.lane.b32.xlu0 %v597, 3
      %v635 = vpop.permute.xlu0 %634
      %v637 = vsel %vm303, %v628, %v635
      %v638 = vsel %vm336, %v637, %v632
      %640 = vrot.lane.b32.xlu0 %v638, 127
      %v641 = vpop.permute.xlu0 %640
      %643 = vrot.lane.b32.xlu0 %v638, 126
      %v644 = vpop.permute.xlu0 %643
      %646 = vrot.lane.b32.xlu0 %v638, 125
      %v647 = vpop.permute.xlu0 %646
      %649 = vrot.lane.b32.xlu0 %v638, 124
      %v650 = vpop.permute.xlu0 %649
      %s652 = scalar_lea.vmem %s2, 16
      %v653 = vld [vmem:[%s652] sm:$0xff]
      %v654 = vld [vmem:[%s652 + $0x8] sm:$0xff]
      %s655 = scalar_lea.vmem %s3, 16
      %v656 = vld [vmem:[%s655] sm:$0xff]
      %v657 = vld [vmem:[%s655 + $0x8] sm:$0xff]
      %659 = vset.pattern.permute.xlu0 0
      %660 = vperm.xlu0 %659, %v656
      %v661 = vpop.permute.xlu0 %660
      %664 = vset.pattern.permute.xlu0 0
      %665 = vperm.xlu0 %664, %v657
      %v666 = vpop.permute.xlu0 %665
      %v669 = vsel %vm392, %v653, 0
      %v672 = vsel %vm392, %v654, 0
      %674 = vmatprep.subr.mxu0 0.0
      %675 = vmatpush1.msra.mxu0 %v611
      %676 = vmatprep.subr.mxu0 0.0
      %677 = vmatpush1.msra.mxu0 %v614
      %678 = vmatprep.subr.mxu0 0.0
      %679 = vmatpush1.msra.mxu0 %v617
      %680 = vmatprep.subr.mxu0 0.0
      %681 = vmatpush1.msra.mxu0 %v620
      %682 = vmatprep.subr.mxu0 0.0
      %683 = vmatpush1.msra.mxu0 %v623
      %684 = vmatprep.subr.mxu0 0.0
      %685 = vmatpush1.msra.mxu0 %v638
      %686 = vmatprep.subr.mxu0 0.0
      %687 = vmatpush1.msra.mxu0 %v641
      %688 = vmatprep.subr.mxu0 0.0
      %689 = vmatpush1.msra.mxu0 %v644
      %690 = vmatprep.subr.mxu0 0.0
      %691 = vmatpush1.msra.mxu0 %v647
      %692 = vmatprep.subr.mxu0 0.0
      %693 = vmatpush1.msra.mxu0 %v650
      %694 = vmatprep.subr.mxu0 0.0
      %695 = vmatpush1.msra.mxu0 0.0
      %696 = vmatprep.subr.mxu0 0.0
      %697 = vmatpush1.msra.mxu0 0.0
      %698 = vmatprep.subr.mxu0 0.0
      %699 = vmatpush1.msra.mxu0 0.0
      %700 = vmatprep.subr.mxu0 0.0
      %701 = vmatpush1.msra.mxu0 0.0
      %702 = vmatprep.subr.mxu0 0.0
      %703 = vmatpush1.msra.mxu0 0.0
      %704 = vmatprep.subr.mxu0 0.0
      %705 = vmatpush1.msra.mxu0 0.0
      %706 = vmatprep.subr.mxu0 0.0
      %707 = vmatpush1.msra.mxu0 0.0
      %708 = vmatprep.subr.mxu0 0.0
      %709 = vmatpush1.msra.mxu0 0.0
      %710 = vmatprep.subr.mxu0 0.0
      %711 = vmatpush1.msra.mxu0 0.0
      %712 = vmatprep.subr.mxu0 0.0
      %713 = vmatpush1.msra.mxu0 0.0
      %714 = vmatprep.subr.mxu0 0.0
      %715 = vmatpush1.msra.mxu0 0.0
      %716 = vmatprep.subr.mxu0 0.0
      %717 = vmatpush1.msra.mxu0 0.0
      %718 = vmatprep.subr.mxu0 0.0
      %719 = vmatpush1.msra.mxu0 0.0
      %720 = vmatprep.subr.mxu0 0.0
      %721 = vmatpush1.msra.mxu0 0.0
      %722 = vmatprep.subr.mxu0 0.0
      %723 = vmatpush1.msra.mxu0 0.0
      %724 = vmatprep.subr.mxu0 0.0
      %725 = vmatpush1.msra.mxu0 0.0
      %726 = vmatprep.subr.mxu0 0.0
      %727 = vmatpush1.msra.mxu0 0.0
      %728 = vmatprep.subr.mxu0 0.0
      %729 = vmatpush1.msra.mxu0 0.0
      %730 = vmatprep.subr.mxu0 0.0
      %731 = vmatpush1.msra.mxu0 0.0
      %732 = vmatprep.subr.mxu0 0.0
      %733 = vmatpush1.msra.mxu0 0.0
      %734 = vmatprep.subr.mxu0 0.0
      %735 = vmatpush1.msra.mxu0 0.0
      %736 = vmatprep.subr.mxu0 0.0
      %737 = vmatpush1.msra.mxu0 0.0
      %738 = vmatprep.mubr.f32.mxu0 0.0
      %739 = vmatmul.mubr.f32.gmra.mrb[0].mxu0 %v669
      %v740 = vpop.f32.mrb[0].mxu0
      %v741 = vadd.f32 %v661, %v740
      %v742 = vpop.f32.mrb[0].mxu0
      %743 = vmatprep.mubr.f32.mxu0 0.0
      %744 = vmatmul.mubr.f32.gmra.mrb[0].mxu0 %v672
      %v745 = vpop.f32.mrb[0].mxu0
      %v746 = vadd.f32 %v666, %v745
      %v747 = vpop.f32.mrb[0].mxu0
      %748 = vdwg.mxu0
      %vm749 = vcmp.gt.f32.partialorder %v741, 0.0
      %vm750 = vcmp.gt.f32.partialorder %v746, 0.0
      %v751 = vmul.f32 %v741, 0.01
      %v752 = vmul.f32 %v746, 0.01
      %v753 = vsel %vm749, %v741, %v751
      %v754 = vsel %vm750, %v746, %v752
      %s755 = scalar_lea.vmem %s4, 16
      %v756 = vld [vmem:[%s755] sm:$0xff]
      %v757 = vld [vmem:[%s755 + $0x8] sm:$0xff]
      %760 = vrot.lane.b32.xlu0 %v753, 127
      %v761 = vpop.permute.xlu0 %760
      %762 = vrot.lane.b32.xlu0 %v754, 127
      %v763 = vpop.permute.xlu0 %762
      %766 = vrot.lane.b32.xlu0 %v753, 126
      %v767 = vpop.permute.xlu0 %766
      %768 = vrot.lane.b32.xlu0 %v754, 126
      %v769 = vpop.permute.xlu0 %768
      %s772 = scalar_lea.vmem %s5, 16
      %v773 = vld [vmem:[%s772] sm:$0xff]
      %v774 = vld [vmem:[%s772 + $0x8] sm:$0xff]
      %776 = vset.pattern.permute.xlu0 0
      %777 = vperm.xlu0 %776, %v773
      %v778 = vpop.permute.xlu0 %777
      %781 = vset.pattern.permute.xlu0 0
      %782 = vperm.xlu0 %781, %v774
      %v783 = vpop.permute.xlu0 %782
      %v786 = vsel %vm508, %v756, 0
      %v789 = vsel %vm508, %v757, 0
      %791 = vmatprep.subr.mxu0 0.0
      %792 = vmatpush1.msra.mxu0 %v753
      %793 = vmatprep.subr.mxu0 0.0
      %794 = vmatpush1.msra.mxu0 %v754
      %795 = vmatprep.subr.mxu0 0.0
      %796 = vmatpush1.msra.mxu0 %v761
      %797 = vmatprep.subr.mxu0 0.0
      %798 = vmatpush1.msra.mxu0 %v763
      %799 = vmatprep.subr.mxu0 0.0
      %800 = vmatpush1.msra.mxu0 %v767
      %801 = vmatprep.subr.mxu0 0.0
      %802 = vmatpush1.msra.mxu0 %v769
      %803 = vmatprep.subr.mxu0 0.0
      %804 = vmatpush1.msra.mxu0 0.0
      %805 = vmatprep.subr.mxu0 0.0
      %806 = vmatpush1.msra.mxu0 0.0
      %807 = vmatprep.subr.mxu0 0.0
      %808 = vmatpush1.msra.mxu0 0.0
      %809 = vmatprep.subr.mxu0 0.0
      %810 = vmatpush1.msra.mxu0 0.0
      %811 = vmatprep.subr.mxu0 0.0
      %812 = vmatpush1.msra.mxu0 0.0
      %813 = vmatprep.subr.mxu0 0.0
      %814 = vmatpush1.msra.mxu0 0.0
      %815 = vmatprep.subr.mxu0 0.0
      %816 = vmatpush1.msra.mxu0 0.0
      %817 = vmatprep.subr.mxu0 0.0
      %818 = vmatpush1.msra.mxu0 0.0
      %819 = vmatprep.subr.mxu0 0.0
      %820 = vmatpush1.msra.mxu0 0.0
      %821 = vmatprep.subr.mxu0 0.0
      %822 = vmatpush1.msra.mxu0 0.0
      %823 = vmatprep.subr.mxu0 0.0
      %824 = vmatpush1.msra.mxu0 0.0
      %825 = vmatprep.subr.mxu0 0.0
      %826 = vmatpush1.msra.mxu0 0.0
      %827 = vmatprep.subr.mxu0 0.0
      %828 = vmatpush1.msra.mxu0 0.0
      %829 = vmatprep.subr.mxu0 0.0
      %830 = vmatpush1.msra.mxu0 0.0
      %831 = vmatprep.subr.mxu0 0.0
      %832 = vmatpush1.msra.mxu0 0.0
      %833 = vmatprep.subr.mxu0 0.0
      %834 = vmatpush1.msra.mxu0 0.0
      %835 = vmatprep.subr.mxu0 0.0
      %836 = vmatpush1.msra.mxu0 0.0
      %837 = vmatprep.subr.mxu0 0.0
      %838 = vmatpush1.msra.mxu0 0.0
      %839 = vmatprep.subr.mxu0 0.0
      %840 = vmatpush1.msra.mxu0 0.0
      %841 = vmatprep.subr.mxu0 0.0
      %842 = vmatpush1.msra.mxu0 0.0
      %843 = vmatprep.subr.mxu0 0.0
      %844 = vmatpush1.msra.mxu0 0.0
      %845 = vmatprep.subr.mxu0 0.0
      %846 = vmatpush1.msra.mxu0 0.0
      %847 = vmatprep.subr.mxu0 0.0
      %848 = vmatpush1.msra.mxu0 0.0
      %849 = vmatprep.subr.mxu0 0.0
      %850 = vmatpush1.msra.mxu0 0.0
      %851 = vmatprep.subr.mxu0 0.0
      %852 = vmatpush1.msra.mxu0 0.0
      %853 = vmatprep.subr.mxu0 0.0
      %854 = vmatpush1.msra.mxu0 0.0
      %855 = vmatprep.mubr.f32.mxu0 0.0
      %856 = vmatmul.mubr.f32.gmra.mrb[0].mxu0 %v786
      %v857 = vpop.f32.mrb[0].mxu0
      %v858 = vadd.f32 %v778, %v857
      %v859 = vpop.f32.mrb[0].mxu0
      %860 = vmatprep.mubr.f32.mxu0 0.0
      %861 = vmatmul.mubr.f32.gmra.mrb[0].mxu0 %v789
      %v862 = vpop.f32.mrb[0].mxu0
      %v863 = vadd.f32 %v783, %v862
      %v864 = vpop.f32.mrb[0].mxu0
      %865 = vdwg.mxu0
      %v866 = vtanh.pop %v858
      %v867 = vtanh.pop %v863
      %v868 = vadd.f32 %v597, %v866
      %v869 = vsub.f32 %v594, %v867
      %871 = vrot.lane.b32.xlu0 %v868, 127
      %v872 = vpop.permute.xlu0 %871
      %874 = vrot.lane.b32.xlu0 %v868, 126
      %v875 = vpop.permute.xlu0 %874
      %877 = vrot.lane.b32.xlu0 %v868, 125
      %v878 = vpop.permute.xlu0 %877
      %v880 = vsel %vm299, %v868, %v872
      %v881 = vsel %vm301, %v880, %v875
      %v882 = vsel %vm303, %v881, %v878
      %883 = vrot.lane.b32.xlu0 %v868, 124
      %v884 = vpop.permute.xlu0 %883
      %v886 = vsel %vm299, %v872, %v875
      %v887 = vsel %vm301, %v886, %v878
      %v888 = vsel %vm303, %v887, %v884
      %890 = vset.pattern.permute.xlu0 0
      %891 = vperm.xlu0 %890, %v882
      %v892 = vpop.permute.xlu0 %891
      %894 = vset.pattern.permute.xlu0 3
      %895 = vperm.xlu0 %894, %v882
      %v896 = vpop.permute.xlu0 %895
      %898 = vrot.lane.b32.xlu0 %v882, 3
      %v899 = vpop.permute.xlu0 %898
      %v901 = vsel %vm303, %v892, %v899
      %v902 = vsel %vm311, %v901, %v896
      %904 = vrot.lane.b32.xlu0 %v902, 127
      %v905 = vpop.permute.xlu0 %904
      %907 = vrot.lane.b32.xlu0 %v902, 126
      %v908 = vpop.permute.xlu0 %907
      %910 = vrot.lane.b32.xlu0 %v902, 125
      %v911 = vpop.permute.xlu0 %910
      %913 = vrot.lane.b32.xlu0 %v902, 124
      %v914 = vpop.permute.xlu0 %913
      %917 = vset.pattern.permute.xlu0 0
      %918 = vperm.xlu0 %917, %v888
      %v919 = vpop.permute.xlu0 %918
      %921 = vset.pattern.permute.xlu0 3
      %922 = vperm.xlu0 %921, %v888
      %v923 = vpop.permute.xlu0 %922
      %925 = vrot.lane.b32.xlu0 %v888, 3
      %v926 = vpop.permute.xlu0 %925
      %v928 = vsel %vm303, %v919, %v926
      %v929 = vsel %vm311, %v928, %v923
      %931 = vrot.lane.b32.xlu0 %v929, 127
      %v932 = vpop.permute.xlu0 %931
      %934 = vrot.lane.b32.xlu0 %v929, 126
      %v935 = vpop.permute.xlu0 %934
      %937 = vrot.lane.b32.xlu0 %v929, 125
      %v938 = vpop.permute.xlu0 %937
      %940 = vrot.lane.b32.xlu0 %v929, 124
      %v941 = vpop.permute.xlu0 %940
      %s943 = scalar_lea.vmem %s2, 32
      %v944 = vld [vmem:[%s943] sm:$0xff]
      %v945 = vld [vmem:[%s943 + $0x8] sm:$0xff]
      %s946 = scalar_lea.vmem %s3, 32
      %v947 = vld [vmem:[%s946] sm:$0xff]
      %v948 = vld [vmem:[%s946 + $0x8] sm:$0xff]
      %950 = vset.pattern.permute.xlu0 0
      %951 = vperm.xlu0 %950, %v947
      %v952 = vpop.permute.xlu0 %951
      %955 = vset.pattern.permute.xlu0 0
      %956 = vperm.xlu0 %955, %v948
      %v957 = vpop.permute.xlu0 %956
      %v960 = vsel %vm392, %v944, 0
      %v963 = vsel %vm392, %v945, 0
      %965 = vmatprep.subr.mxu0 0.0
      %966 = vmatpush1.msra.mxu0 %v902
      %967 = vmatprep.subr.mxu0 0.0
      %968 = vmatpush1.msra.mxu0 %v905
      %969 = vmatprep.subr.mxu0 0.0
      %970 = vmatpush1.msra.mxu0 %v908
      %971 = vmatprep.subr.mxu0 0.0
      %972 = vmatpush1.msra.mxu0 %v911
      %973 = vmatprep.subr.mxu0 0.0
      %974 = vmatpush1.msra.mxu0 %v914
      %975 = vmatprep.subr.mxu0 0.0
      %976 = vmatpush1.msra.mxu0 %v929
      %977 = vmatprep.subr.mxu0 0.0
      %978 = vmatpush1.msra.mxu0 %v932
      %979 = vmatprep.subr.mxu0 0.0
      %980 = vmatpush1.msra.mxu0 %v935
      %981 = vmatprep.subr.mxu0 0.0
      %982 = vmatpush1.msra.mxu0 %v938
      %983 = vmatprep.subr.mxu0 0.0
      %984 = vmatpush1.msra.mxu0 %v941
      %985 = vmatprep.subr.mxu0 0.0
      %986 = vmatpush1.msra.mxu0 0.0
      %987 = vmatprep.subr.mxu0 0.0
      %988 = vmatpush1.msra.mxu0 0.0
      %989 = vmatprep.subr.mxu0 0.0
      %990 = vmatpush1.msra.mxu0 0.0
      %991 = vmatprep.subr.mxu0 0.0
      %992 = vmatpush1.msra.mxu0 0.0
      %993 = vmatprep.subr.mxu0 0.0
      %994 = vmatpush1.msra.mxu0 0.0
      %995 = vmatprep.subr.mxu0 0.0
      %996 = vmatpush1.msra.mxu0 0.0
      %997 = vmatprep.subr.mxu0 0.0
      %998 = vmatpush1.msra.mxu0 0.0
      %999 = vmatprep.subr.mxu0 0.0
      %1000 = vmatpush1.msra.mxu0 0.0
      %1001 = vmatprep.subr.mxu0 0.0
      %1002 = vmatpush1.msra.mxu0 0.0
      %1003 = vmatprep.subr.mxu0 0.0
      %1004 = vmatpush1.msra.mxu0 0.0
      %1005 = vmatprep.subr.mxu0 0.0
      %1006 = vmatpush1.msra.mxu0 0.0
      %1007 = vmatprep.subr.mxu0 0.0
      %1008 = vmatpush1.msra.mxu0 0.0
      %1009 = vmatprep.subr.mxu0 0.0
      %1010 = vmatpush1.msra.mxu0 0.0
      %1011 = vmatprep.subr.mxu0 0.0
      %1012 = vmatpush1.msra.mxu0 0.0
      %1013 = vmatprep.subr.mxu0 0.0
      %1014 = vmatpush1.msra.mxu0 0.0
      %1015 = vmatprep.subr.mxu0 0.0
      %1016 = vmatpush1.msra.mxu0 0.0
      %1017 = vmatprep.subr.mxu0 0.0
      %1018 = vmatpush1.msra.mxu0 0.0
      %1019 = vmatprep.subr.mxu0 0.0
      %1020 = vmatpush1.msra.mxu0 0.0
      %1021 = vmatprep.subr.mxu0 0.0
      %1022 = vmatpush1.msra.mxu0 0.0
      %1023 = vmatprep.subr.mxu0 0.0
      %1024 = vmatpush1.msra.mxu0 0.0
      %1025 = vmatprep.subr.mxu0 0.0
      %1026 = vmatpush1.msra.mxu0 0.0
      %1027 = vmatprep.subr.mxu0 0.0
      %1028 = vmatpush1.msra.mxu0 0.0
      %1029 = vmatprep.mubr.f32.mxu0 0.0
      %1030 = vmatmul.mubr.f32.gmra.mrb[0].mxu0 %v960
      %v1031 = vpop.f32.mrb[0].mxu0
      %v1032 = vadd.f32 %v952, %v1031
      %v1033 = vpop.f32.mrb[0].mxu0
      %1034 = vmatprep.mubr.f32.mxu0 0.0
      %1035 = vmatmul.mubr.f32.gmra.mrb[0].mxu0 %v963
      %v1036 = vpop.f32.mrb[0].mxu0
      %v1037 = vadd.f32 %v957, %v1036
      %v1038 = vpop.f32.mrb[0].mxu0
      %1039 = vdwg.mxu0
      %vm1040 = vcmp.gt.f32.partialorder %v1032, 0.0
      %vm1041 = vcmp.gt.f32.partialorder %v1037, 0.0
      %v1042 = vmul.f32 %v1032, 0.01
      %v1043 = vmul.f32 %v1037, 0.01
      %v1044 = vsel %vm1040, %v1032, %v1042
      %v1045 = vsel %vm1041, %v1037, %v1043
      %s1046 = scalar_lea.vmem %s4, 32
      %v1047 = vld [vmem:[%s1046] sm:$0xff]
      %v1048 = vld [vmem:[%s1046 + $0x8] sm:$0xff]
      %1051 = vrot.lane.b32.xlu0 %v1044, 127
      %v1052 = vpop.permute.xlu0 %1051
      %1053 = vrot.lane.b32.xlu0 %v1045, 127
      %v1054 = vpop.permute.xlu0 %1053
      %1057 = vrot.lane.b32.xlu0 %v1044, 126
      %v1058 = vpop.permute.xlu0 %1057
      %1059 = vrot.lane.b32.xlu0 %v1045, 126
      %v1060 = vpop.permute.xlu0 %1059
      %s1063 = scalar_lea.vmem %s5, 32
      %v1064 = vld [vmem:[%s1063] sm:$0xff]
      %v1065 = vld [vmem:[%s1063 + $0x8] sm:$0xff]
      %1067 = vset.pattern.permute.xlu0 0
      %1068 = vperm.xlu0 %1067, %v1064
      %v1069 = vpop.permute.xlu0 %1068
      %1072 = vset.pattern.permute.xlu0 0
      %1073 = vperm.xlu0 %1072, %v1065
      %v1074 = vpop.permute.xlu0 %1073
      %v1077 = vsel %vm508, %v1047, 0
      %v1080 = vsel %vm508, %v1048, 0
      %1082 = vmatprep.subr.mxu0 0.0
      %1083 = vmatpush1.msra.mxu0 %v1044
      %1084 = vmatprep.subr.mxu0 0.0
      %1085 = vmatpush1.msra.mxu0 %v1045
      %1086 = vmatprep.subr.mxu0 0.0
      %1087 = vmatpush1.msra.mxu0 %v1052
      %1088 = vmatprep.subr.mxu0 0.0
      %1089 = vmatpush1.msra.mxu0 %v1054
      %1090 = vmatprep.subr.mxu0 0.0
      %1091 = vmatpush1.msra.mxu0 %v1058
      %1092 = vmatprep.subr.mxu0 0.0
      %1093 = vmatpush1.msra.mxu0 %v1060
      %1094 = vmatprep.subr.mxu0 0.0
      %1095 = vmatpush1.msra.mxu0 0.0
      %1096 = vmatprep.subr.mxu0 0.0
      %1097 = vmatpush1.msra.mxu0 0.0
      %1098 = vmatprep.subr.mxu0 0.0
      %1099 = vmatpush1.msra.mxu0 0.0
      %1100 = vmatprep.subr.mxu0 0.0
      %1101 = vmatpush1.msra.mxu0 0.0
      %1102 = vmatprep.subr.mxu0 0.0
      %1103 = vmatpush1.msra.mxu0 0.0
      %1104 = vmatprep.subr.mxu0 0.0
      %1105 = vmatpush1.msra.mxu0 0.0
      %1106 = vmatprep.subr.mxu0 0.0
      %1107 = vmatpush1.msra.mxu0 0.0
      %1108 = vmatprep.subr.mxu0 0.0
      %1109 = vmatpush1.msra.mxu0 0.0
      %1110 = vmatprep.subr.mxu0 0.0
      %1111 = vmatpush1.msra.mxu0 0.0
      %1112 = vmatprep.subr.mxu0 0.0
      %1113 = vmatpush1.msra.mxu0 0.0
      %1114 = vmatprep.subr.mxu0 0.0
      %1115 = vmatpush1.msra.mxu0 0.0
      %1116 = vmatprep.subr.mxu0 0.0
      %1117 = vmatpush1.msra.mxu0 0.0
      %1118 = vmatprep.subr.mxu0 0.0
      %1119 = vmatpush1.msra.mxu0 0.0
      %1120 = vmatprep.subr.mxu0 0.0
      %1121 = vmatpush1.msra.mxu0 0.0
      %1122 = vmatprep.subr.mxu0 0.0
      %1123 = vmatpush1.msra.mxu0 0.0
      %1124 = vmatprep.subr.mxu0 0.0
      %1125 = vmatpush1.msra.mxu0 0.0
      %1126 = vmatprep.subr.mxu0 0.0
      %1127 = vmatpush1.msra.mxu0 0.0
      %1128 = vmatprep.subr.mxu0 0.0
      %1129 = vmatpush1.msra.mxu0 0.0
      %1130 = vmatprep.subr.mxu0 0.0
      %1131 = vmatpush1.msra.mxu0 0.0
      %1132 = vmatprep.subr.mxu0 0.0
      %1133 = vmatpush1.msra.mxu0 0.0
      %1134 = vmatprep.subr.mxu0 0.0
      %1135 = vmatpush1.msra.mxu0 0.0
      %1136 = vmatprep.subr.mxu0 0.0
      %1137 = vmatpush1.msra.mxu0 0.0
      %1138 = vmatprep.subr.mxu0 0.0
      %1139 = vmatpush1.msra.mxu0 0.0
      %1140 = vmatprep.subr.mxu0 0.0
      %1141 = vmatpush1.msra.mxu0 0.0
      %1142 = vmatprep.subr.mxu0 0.0
      %1143 = vmatpush1.msra.mxu0 0.0
      %1144 = vmatprep.subr.mxu0 0.0
      %1145 = vmatpush1.msra.mxu0 0.0
      %1146 = vmatprep.mubr.f32.mxu0 0.0
      %1147 = vmatmul.mubr.f32.gmra.mrb[0].mxu0 %v1077
      %v1148 = vpop.f32.mrb[0].mxu0
      %v1149 = vadd.f32 %v1069, %v1148
      %v1150 = vpop.f32.mrb[0].mxu0
      %1151 = vmatprep.mubr.f32.mxu0 0.0
      %1152 = vmatmul.mubr.f32.gmra.mrb[0].mxu0 %v1080
      %v1153 = vpop.f32.mrb[0].mxu0
      %v1154 = vadd.f32 %v1074, %v1153
      %v1155 = vpop.f32.mrb[0].mxu0
      %1156 = vdwg.mxu0
      %v1157 = vtanh.pop %v1149
      %v1158 = vtanh.pop %v1154
      %v1159 = vmul.f32 %v1157, 1.442695
      %v1160 = vpow.pop %v1159
      %v1161 = vmul.f32 %v888, %v1160
      %v1162 = vmul.f32 %v1158, 1.442695
      %v1163 = vpow.pop %v1162
      %v1164 = vmul.f32 %v882, %v1163
      %1166 = vset.pattern.permute.xlu0 0
      %1167 = vperm.xlu0 %1166, %v1161
      %v1168 = vpop.permute.xlu0 %1167
      %1170 = vset.pattern.permute.xlu0 3
      %1171 = vperm.xlu0 %1170, %v1161
      %v1172 = vpop.permute.xlu0 %1171
      %1174 = vrot.lane.b32.xlu0 %v1161, 3
      %v1175 = vpop.permute.xlu0 %1174
      %v1177 = vsel %vm303, %v1168, %v1175
      %v1178 = vsel %vm311, %v1177, %v1172
      %1180 = vrot.lane.b32.xlu0 %v1178, 127
      %v1181 = vpop.permute.xlu0 %1180
      %1183 = vrot.lane.b32.xlu0 %v1178, 126
      %v1184 = vpop.permute.xlu0 %1183
      %1186 = vrot.lane.b32.xlu0 %v1178, 125
      %v1187 = vpop.permute.xlu0 %1186
      %1189 = vrot.lane.b32.xlu0 %v1178, 124
      %v1190 = vpop.permute.xlu0 %1189
      %1193 = vset.pattern.permute.xlu0 0
      %1194 = vperm.xlu0 %1193, %v1164
      %v1195 = vpop.permute.xlu0 %1194
      %1197 = vset.pattern.permute.xlu0 3
      %1198 = vperm.xlu0 %1197, %v1164
      %v1199 = vpop.permute.xlu0 %1198
      %1201 = vrot.lane.b32.xlu0 %v1164, 3
      %v1202 = vpop.permute.xlu0 %1201
      %v1204 = vsel %vm303, %v1195, %v1202
      %v1205 = vsel %vm311, %v1204, %v1199
      %1207 = vrot.lane.b32.xlu0 %v1205, 127
      %v1208 = vpop.permute.xlu0 %1207
      %1210 = vrot.lane.b32.xlu0 %v1205, 126
      %v1211 = vpop.permute.xlu0 %1210
      %1213 = vrot.lane.b32.xlu0 %v1205, 125
      %v1214 = vpop.permute.xlu0 %1213
      %1216 = vrot.lane.b32.xlu0 %v1205, 124
      %v1217 = vpop.permute.xlu0 %1216
      %s1219 = scalar_lea.vmem %s2, 48
      %v1220 = vld [vmem:[%s1219] sm:$0xff]
      %v1221 = vld [vmem:[%s1219 + $0x8] sm:$0xff]
      %s1222 = scalar_lea.vmem %s3, 48
      %v1223 = vld [vmem:[%s1222] sm:$0xff]
      %v1224 = vld [vmem:[%s1222 + $0x8] sm:$0xff]
      %1226 = vset.pattern.permute.xlu0 0
      %1227 = vperm.xlu0 %1226, %v1223
      %v1228 = vpop.permute.xlu0 %1227
      %1231 = vset.pattern.permute.xlu0 0
      %1232 = vperm.xlu0 %1231, %v1224
      %v1233 = vpop.permute.xlu0 %1232
      %v1236 = vsel %vm392, %v1220, 0
      %v1239 = vsel %vm392, %v1221, 0
      %1241 = vmatprep.subr.mxu0 0.0
      %1242 = vmatpush1.msra.mxu0 %v1178
      %1243 = vmatprep.subr.mxu0 0.0
      %1244 = vmatpush1.msra.mxu0 %v1181
      %1245 = vmatprep.subr.mxu0 0.0
      %1246 = vmatpush1.msra.mxu0 %v1184
      %1247 = vmatprep.subr.mxu0 0.0
      %1248 = vmatpush1.msra.mxu0 %v1187
      %1249 = vmatprep.subr.mxu0 0.0
      %1250 = vmatpush1.msra.mxu0 %v1190
      %1251 = vmatprep.subr.mxu0 0.0
      %1252 = vmatpush1.msra.mxu0 %v1205
      %1253 = vmatprep.subr.mxu0 0.0
      %1254 = vmatpush1.msra.mxu0 %v1208
      %1255 = vmatprep.subr.mxu0 0.0
      %1256 = vmatpush1.msra.mxu0 %v1211
      %1257 = vmatprep.subr.mxu0 0.0
      %1258 = vmatpush1.msra.mxu0 %v1214
      %1259 = vmatprep.subr.mxu0 0.0
      %1260 = vmatpush1.msra.mxu0 %v1217
      %1261 = vmatprep.subr.mxu0 0.0
      %1262 = vmatpush1.msra.mxu0 0.0
      %1263 = vmatprep.subr.mxu0 0.0
      %1264 = vmatpush1.msra.mxu0 0.0
      %1265 = vmatprep.subr.mxu0 0.0
      %1266 = vmatpush1.msra.mxu0 0.0
      %1267 = vmatprep.subr.mxu0 0.0
      %1268 = vmatpush1.msra.mxu0 0.0
      %1269 = vmatprep.subr.mxu0 0.0
      %1270 = vmatpush1.msra.mxu0 0.0
      %1271 = vmatprep.subr.mxu0 0.0
      %1272 = vmatpush1.msra.mxu0 0.0
      %1273 = vmatprep.subr.mxu0 0.0
      %1274 = vmatpush1.msra.mxu0 0.0
      %1275 = vmatprep.subr.mxu0 0.0
      %1276 = vmatpush1.msra.mxu0 0.0
      %1277 = vmatprep.subr.mxu0 0.0
      %1278 = vmatpush1.msra.mxu0 0.0
      %1279 = vmatprep.subr.mxu0 0.0
      %1280 = vmatpush1.msra.mxu0 0.0
      %1281 = vmatprep.subr.mxu0 0.0
      %1282 = vmatpush1.msra.mxu0 0.0
      %1283 = vmatprep.subr.mxu0 0.0
      %1284 = vmatpush1.msra.mxu0 0.0
      %1285 = vmatprep.subr.mxu0 0.0
      %1286 = vmatpush1.msra.mxu0 0.0
      %1287 = vmatprep.subr.mxu0 0.0
      %1288 = vmatpush1.msra.mxu0 0.0
      %1289 = vmatprep.subr.mxu0 0.0
      %1290 = vmatpush1.msra.mxu0 0.0
      %1291 = vmatprep.subr.mxu0 0.0
      %1292 = vmatpush1.msra.mxu0 0.0
      %1293 = vmatprep.subr.mxu0 0.0
      %1294 = vmatpush1.msra.mxu0 0.0
      %1295 = vmatprep.subr.mxu0 0.0
      %1296 = vmatpush1.msra.mxu0 0.0
      %1297 = vmatprep.subr.mxu0 0.0
      %1298 = vmatpush1.msra.mxu0 0.0
      %1299 = vmatprep.subr.mxu0 0.0
      %1300 = vmatpush1.msra.mxu0 0.0
      %1301 = vmatprep.subr.mxu0 0.0
      %1302 = vmatpush1.msra.mxu0 0.0
      %1303 = vmatprep.subr.mxu0 0.0
      %1304 = vmatpush1.msra.mxu0 0.0
      %1305 = vmatprep.mubr.f32.mxu0 0.0
      %1306 = vmatmul.mubr.f32.gmra.mrb[0].mxu0 %v1236
      %v1307 = vpop.f32.mrb[0].mxu0
      %v1308 = vadd.f32 %v1228, %v1307
      %v1309 = vpop.f32.mrb[0].mxu0
      %1310 = vmatprep.mubr.f32.mxu0 0.0
      %1311 = vmatmul.mubr.f32.gmra.mrb[0].mxu0 %v1239
      %v1312 = vpop.f32.mrb[0].mxu0
      %v1313 = vadd.f32 %v1233, %v1312
      %v1314 = vpop.f32.mrb[0].mxu0
      %1315 = vdwg.mxu0
      %vm1316 = vcmp.gt.f32.partialorder %v1308, 0.0
      %vm1317 = vcmp.gt.f32.partialorder %v1313, 0.0
      %v1318 = vmul.f32 %v1308, 0.01
      %v1319 = vmul.f32 %v1313, 0.01
      %v1320 = vsel %vm1316, %v1308, %v1318
      %v1321 = vsel %vm1317, %v1313, %v1319
      %s1322 = scalar_lea.vmem %s4, 48
      %v1323 = vld [vmem:[%s1322] sm:$0xff]
      %v1324 = vld [vmem:[%s1322 + $0x8] sm:$0xff]
      %1327 = vrot.lane.b32.xlu0 %v1320, 127
      %v1328 = vpop.permute.xlu0 %1327
      %1329 = vrot.lane.b32.xlu0 %v1321, 127
      %v1330 = vpop.permute.xlu0 %1329
      %1333 = vrot.lane.b32.xlu0 %v1320, 126
      %v1334 = vpop.permute.xlu0 %1333
      %1335 = vrot.lane.b32.xlu0 %v1321, 126
      %v1336 = vpop.permute.xlu0 %1335
      %s1339 = scalar_lea.vmem %s5, 48
      %v1340 = vld [vmem:[%s1339] sm:$0xff]
      %v1341 = vld [vmem:[%s1339 + $0x8] sm:$0xff]
      %1343 = vset.pattern.permute.xlu0 0
      %1344 = vperm.xlu0 %1343, %v1340
      %v1345 = vpop.permute.xlu0 %1344
      %1348 = vset.pattern.permute.xlu0 0
      %1349 = vperm.xlu0 %1348, %v1341
      %v1350 = vpop.permute.xlu0 %1349
      %v1353 = vsel %vm508, %v1323, 0
      %v1356 = vsel %vm508, %v1324, 0
      %1358 = vmatprep.subr.mxu0 0.0
      %1359 = vmatpush1.msra.mxu0 %v1320
      %1360 = vmatprep.subr.mxu0 0.0
      %1361 = vmatpush1.msra.mxu0 %v1321
      %1362 = vmatprep.subr.mxu0 0.0
      %1363 = vmatpush1.msra.mxu0 %v1328
      %1364 = vmatprep.subr.mxu0 0.0
      %1365 = vmatpush1.msra.mxu0 %v1330
      %1366 = vmatprep.subr.mxu0 0.0
      %1367 = vmatpush1.msra.mxu0 %v1334
      %1368 = vmatprep.subr.mxu0 0.0
      %1369 = vmatpush1.msra.mxu0 %v1336
      %1370 = vmatprep.subr.mxu0 0.0
      %1371 = vmatpush1.msra.mxu0 0.0
      %1372 = vmatprep.subr.mxu0 0.0
      %1373 = vmatpush1.msra.mxu0 0.0
      %1374 = vmatprep.subr.mxu0 0.0
      %1375 = vmatpush1.msra.mxu0 0.0
      %1376 = vmatprep.subr.mxu0 0.0
      %1377 = vmatpush1.msra.mxu0 0.0
      %1378 = vmatprep.subr.mxu0 0.0
      %1379 = vmatpush1.msra.mxu0 0.0
      %1380 = vmatprep.subr.mxu0 0.0
      %1381 = vmatpush1.msra.mxu0 0.0
      %1382 = vmatprep.subr.mxu0 0.0
      %1383 = vmatpush1.msra.mxu0 0.0
      %1384 = vmatprep.subr.mxu0 0.0
      %1385 = vmatpush1.msra.mxu0 0.0
      %1386 = vmatprep.subr.mxu0 0.0
      %1387 = vmatpush1.msra.mxu0 0.0
      %1388 = vmatprep.subr.mxu0 0.0
      %1389 = vmatpush1.msra.mxu0 0.0
      %1390 = vmatprep.subr.mxu0 0.0
      %1391 = vmatpush1.msra.mxu0 0.0
      %1392 = vmatprep.subr.mxu0 0.0
      %1393 = vmatpush1.msra.mxu0 0.0
      %1394 = vmatprep.subr.mxu0 0.0
      %1395 = vmatpush1.msra.mxu0 0.0
      %1396 = vmatprep.subr.mxu0 0.0
      %1397 = vmatpush1.msra.mxu0 0.0
      %1398 = vmatprep.subr.mxu0 0.0
      %1399 = vmatpush1.msra.mxu0 0.0
      %1400 = vmatprep.subr.mxu0 0.0
      %1401 = vmatpush1.msra.mxu0 0.0
      %1402 = vmatprep.subr.mxu0 0.0
      %1403 = vmatpush1.msra.mxu0 0.0
      %1404 = vmatprep.subr.mxu0 0.0
      %1405 = vmatpush1.msra.mxu0 0.0
      %1406 = vmatprep.subr.mxu0 0.0
      %1407 = vmatpush1.msra.mxu0 0.0
      %1408 = vmatprep.subr.mxu0 0.0
      %1409 = vmatpush1.msra.mxu0 0.0
      %1410 = vmatprep.subr.mxu0 0.0
      %1411 = vmatpush1.msra.mxu0 0.0
      %1412 = vmatprep.subr.mxu0 0.0
      %1413 = vmatpush1.msra.mxu0 0.0
      %1414 = vmatprep.subr.mxu0 0.0
      %1415 = vmatpush1.msra.mxu0 0.0
      %1416 = vmatprep.subr.mxu0 0.0
      %1417 = vmatpush1.msra.mxu0 0.0
      %1418 = vmatprep.subr.mxu0 0.0
      %1419 = vmatpush1.msra.mxu0 0.0
      %1420 = vmatprep.subr.mxu0 0.0
      %1421 = vmatpush1.msra.mxu0 0.0
      %1422 = vmatprep.mubr.f32.mxu0 0.0
      %1423 = vmatmul.mubr.f32.gmra.mrb[0].mxu0 %v1353
      %v1424 = vpop.f32.mrb[0].mxu0
      %v1425 = vadd.f32 %v1345, %v1424
      %v1426 = vpop.f32.mrb[0].mxu0
      %1427 = vmatprep.mubr.f32.mxu0 0.0
      %1428 = vmatmul.mubr.f32.gmra.mrb[0].mxu0 %v1356
      %v1429 = vpop.f32.mrb[0].mxu0
      %v1430 = vadd.f32 %v1350, %v1429
      %v1431 = vpop.f32.mrb[0].mxu0
      %1432 = vdwg.mxu0
      %v1433 = vtanh.pop %v1425
      %v1434 = vtanh.pop %v1430
      %v1435 = vadd.f32 %v1164, %v1433
      %v1436 = vsub.f32 %v1161, %v1434
      %1438 = vrot.lane.b32.xlu0 %v869, 127
      %v1439 = vpop.permute.xlu0 %1438
      %1441 = vrot.lane.b32.xlu0 %v869, 126
      %v1442 = vpop.permute.xlu0 %1441
      %1444 = vrot.lane.b32.xlu0 %v869, 125
      %v1445 = vpop.permute.xlu0 %1444
      %v1447 = vsel %vm299, %v869, %v1439
      %v1448 = vsel %vm301, %v1447, %v1442
      %v1449 = vsel %vm303, %v1448, %v1445
      %1450 = vrot.lane.b32.xlu0 %v869, 124
      %v1451 = vpop.permute.xlu0 %1450
      %v1453 = vsel %vm299, %v1439, %v1442
      %v1454 = vsel %vm301, %v1453, %v1445
      %v1455 = vsel %vm303, %v1454, %v1451
      %1457 = vset.pattern.permute.xlu0 0
      %1458 = vperm.xlu0 %1457, %v1449
      %v1459 = vpop.permute.xlu0 %1458
      %1461 = vset.pattern.permute.xlu0 3
      %1462 = vperm.xlu0 %1461, %v1449
      %v1463 = vpop.permute.xlu0 %1462
      %1465 = vrot.lane.b32.xlu0 %v1449, 3
      %v1466 = vpop.permute.xlu0 %1465
      %v1468 = vsel %vm303, %v1459, %v1466
      %v1469 = vsel %vm311, %v1468, %v1463
      %1471 = vrot.lane.b32.xlu0 %v1469, 127
      %v1472 = vpop.permute.xlu0 %1471
      %1474 = vrot.lane.b32.xlu0 %v1469, 126
      %v1475 = vpop.permute.xlu0 %1474
      %1477 = vrot.lane.b32.xlu0 %v1469, 125
      %v1478 = vpop.permute.xlu0 %1477
      %1480 = vrot.lane.b32.xlu0 %v1469, 124
      %v1481 = vpop.permute.xlu0 %1480
      %1484 = vset.pattern.permute.xlu0 0
      %1485 = vperm.xlu0 %1484, %v1455
      %v1486 = vpop.permute.xlu0 %1485
      %1488 = vset.pattern.permute.xlu0 3
      %1489 = vperm.xlu0 %1488, %v1455
      %v1490 = vpop.permute.xlu0 %1489
      %1492 = vrot.lane.b32.xlu0 %v1455, 3
      %v1493 = vpop.permute.xlu0 %1492
      %v1495 = vsel %vm303, %v1486, %v1493
      %v1496 = vsel %vm311, %v1495, %v1490
      %1498 = vrot.lane.b32.xlu0 %v1496, 127
      %v1499 = vpop.permute.xlu0 %1498
      %1501 = vrot.lane.b32.xlu0 %v1496, 126
      %v1502 = vpop.permute.xlu0 %1501
      %1504 = vrot.lane.b32.xlu0 %v1496, 125
      %v1505 = vpop.permute.xlu0 %1504
      %1507 = vrot.lane.b32.xlu0 %v1496, 124
      %v1508 = vpop.permute.xlu0 %1507
      %s1510 = scalar_lea.vmem %s2, 64
      %v1511 = vld [vmem:[%s1510] sm:$0xff]
      %v1512 = vld [vmem:[%s1510 + $0x8] sm:$0xff]
      %s1513 = scalar_lea.vmem %s3, 64
      %v1514 = vld [vmem:[%s1513] sm:$0xff]
      %v1515 = vld [vmem:[%s1513 + $0x8] sm:$0xff]
      %1517 = vset.pattern.permute.xlu0 0
      %1518 = vperm.xlu0 %1517, %v1514
      %v1519 = vpop.permute.xlu0 %1518
      %1522 = vset.pattern.permute.xlu0 0
      %1523 = vperm.xlu0 %1522, %v1515
      %v1524 = vpop.permute.xlu0 %1523
      %v1527 = vsel %vm392, %v1511, 0
      %v1530 = vsel %vm392, %v1512, 0
      %1532 = vmatprep.subr.mxu0 0.0
      %1533 = vmatpush1.msra.mxu0 %v1469
      %1534 = vmatprep.subr.mxu0 0.0
      %1535 = vmatpush1.msra.mxu0 %v1472
      %1536 = vmatprep.subr.mxu0 0.0
      %1537 = vmatpush1.msra.mxu0 %v1475
      %1538 = vmatprep.subr.mxu0 0.0
      %1539 = vmatpush1.msra.mxu0 %v1478
      %1540 = vmatprep.subr.mxu0 0.0
      %1541 = vmatpush1.msra.mxu0 %v1481
      %1542 = vmatprep.subr.mxu0 0.0
      %1543 = vmatpush1.msra.mxu0 %v1496
      %1544 = vmatprep.subr.mxu0 0.0
      %1545 = vmatpush1.msra.mxu0 %v1499
      %1546 = vmatprep.subr.mxu0 0.0
      %1547 = vmatpush1.msra.mxu0 %v1502
      %1548 = vmatprep.subr.mxu0 0.0
      %1549 = vmatpush1.msra.mxu0 %v1505
      %1550 = vmatprep.subr.mxu0 0.0
      %1551 = vmatpush1.msra.mxu0 %v1508
      %1552 = vmatprep.subr.mxu0 0.0
      %1553 = vmatpush1.msra.mxu0 0.0
      %1554 = vmatprep.subr.mxu0 0.0
      %1555 = vmatpush1.msra.mxu0 0.0
      %1556 = vmatprep.subr.mxu0 0.0
      %1557 = vmatpush1.msra.mxu0 0.0
      %1558 = vmatprep.subr.mxu0 0.0
      %1559 = vmatpush1.msra.mxu0 0.0
      %1560 = vmatprep.subr.mxu0 0.0
      %1561 = vmatpush1.msra.mxu0 0.0
      %1562 = vmatprep.subr.mxu0 0.0
      %1563 = vmatpush1.msra.mxu0 0.0
      %1564 = vmatprep.subr.mxu0 0.0
      %1565 = vmatpush1.msra.mxu0 0.0
      %1566 = vmatprep.subr.mxu0 0.0
      %1567 = vmatpush1.msra.mxu0 0.0
      %1568 = vmatprep.subr.mxu0 0.0
      %1569 = vmatpush1.msra.mxu0 0.0
      %1570 = vmatprep.subr.mxu0 0.0
      %1571 = vmatpush1.msra.mxu0 0.0
      %1572 = vmatprep.subr.mxu0 0.0
      %1573 = vmatpush1.msra.mxu0 0.0
      %1574 = vmatprep.subr.mxu0 0.0
      %1575 = vmatpush1.msra.mxu0 0.0
      %1576 = vmatprep.subr.mxu0 0.0
      %1577 = vmatpush1.msra.mxu0 0.0
      %1578 = vmatprep.subr.mxu0 0.0
      %1579 = vmatpush1.msra.mxu0 0.0
      %1580 = vmatprep.subr.mxu0 0.0
      %1581 = vmatpush1.msra.mxu0 0.0
      %1582 = vmatprep.subr.mxu0 0.0
      %1583 = vmatpush1.msra.mxu0 0.0
      %1584 = vmatprep.subr.mxu0 0.0
      %1585 = vmatpush1.msra.mxu0 0.0
      %1586 = vmatprep.subr.mxu0 0.0
      %1587 = vmatpush1.msra.mxu0 0.0
      %1588 = vmatprep.subr.mxu0 0.0
      %1589 = vmatpush1.msra.mxu0 0.0
      %1590 = vmatprep.subr.mxu0 0.0
      %1591 = vmatpush1.msra.mxu0 0.0
      %1592 = vmatprep.subr.mxu0 0.0
      %1593 = vmatpush1.msra.mxu0 0.0
      %1594 = vmatprep.subr.mxu0 0.0
      %1595 = vmatpush1.msra.mxu0 0.0
      %1596 = vmatprep.mubr.f32.mxu0 0.0
      %1597 = vmatmul.mubr.f32.gmra.mrb[0].mxu0 %v1527
      %v1598 = vpop.f32.mrb[0].mxu0
      %v1599 = vadd.f32 %v1519, %v1598
      %v1600 = vpop.f32.mrb[0].mxu0
      %1601 = vmatprep.mubr.f32.mxu0 0.0
      %1602 = vmatmul.mubr.f32.gmra.mrb[0].mxu0 %v1530
      %v1603 = vpop.f32.mrb[0].mxu0
      %v1604 = vadd.f32 %v1524, %v1603
      %v1605 = vpop.f32.mrb[0].mxu0
      %1606 = vdwg.mxu0
      %vm1607 = vcmp.gt.f32.partialorder %v1599, 0.0
      %vm1608 = vcmp.gt.f32.partialorder %v1604, 0.0
      %v1609 = vmul.f32 %v1599, 0.01
      %v1610 = vmul.f32 %v1604, 0.01
      %v1611 = vsel %vm1607, %v1599, %v1609
      %v1612 = vsel %vm1608, %v1604, %v1610
      %s1613 = scalar_lea.vmem %s4, 64
      %v1614 = vld [vmem:[%s1613] sm:$0xff]
      %v1615 = vld [vmem:[%s1613 + $0x8] sm:$0xff]
      %1618 = vrot.lane.b32.xlu0 %v1611, 127
      %v1619 = vpop.permute.xlu0 %1618
      %1620 = vrot.lane.b32.xlu0 %v1612, 127
      %v1621 = vpop.permute.xlu0 %1620
      %1624 = vrot.lane.b32.xlu0 %v1611, 126
      %v1625 = vpop.permute.xlu0 %1624
      %1626 = vrot.lane.b32.xlu0 %v1612, 126
      %v1627 = vpop.permute.xlu0 %1626
      %s1630 = scalar_lea.vmem %s5, 64
      %v1631 = vld [vmem:[%s1630] sm:$0xff]
      %v1632 = vld [vmem:[%s1630 + $0x8] sm:$0xff]
      %1634 = vset.pattern.permute.xlu0 0
      %1635 = vperm.xlu0 %1634, %v1631
      %v1636 = vpop.permute.xlu0 %1635
      %1639 = vset.pattern.permute.xlu0 0
      %1640 = vperm.xlu0 %1639, %v1632
      %v1641 = vpop.permute.xlu0 %1640
      %v1644 = vsel %vm508, %v1614, 0
      %v1647 = vsel %vm508, %v1615, 0
      %1649 = vmatprep.subr.mxu0 0.0
      %1650 = vmatpush1.msra.mxu0 %v1611
      %1651 = vmatprep.subr.mxu0 0.0
      %1652 = vmatpush1.msra.mxu0 %v1612
      %1653 = vmatprep.subr.mxu0 0.0
      %1654 = vmatpush1.msra.mxu0 %v1619
      %1655 = vmatprep.subr.mxu0 0.0
      %1656 = vmatpush1.msra.mxu0 %v1621
      %1657 = vmatprep.subr.mxu0 0.0
      %1658 = vmatpush1.msra.mxu0 %v1625
      %1659 = vmatprep.subr.mxu0 0.0
      %1660 = vmatpush1.msra.mxu0 %v1627
      %1661 = vmatprep.subr.mxu0 0.0
      %1662 = vmatpush1.msra.mxu0 0.0
      %1663 = vmatprep.subr.mxu0 0.0
      %1664 = vmatpush1.msra.mxu0 0.0
      %1665 = vmatprep.subr.mxu0 0.0
      %1666 = vmatpush1.msra.mxu0 0.0
      %1667 = vmatprep.subr.mxu0 0.0
      %1668 = vmatpush1.msra.mxu0 0.0
      %1669 = vmatprep.subr.mxu0 0.0
      %1670 = vmatpush1.msra.mxu0 0.0
      %1671 = vmatprep.subr.mxu0 0.0
      %1672 = vmatpush1.msra.mxu0 0.0
      %1673 = vmatprep.subr.mxu0 0.0
      %1674 = vmatpush1.msra.mxu0 0.0
      %1675 = vmatprep.subr.mxu0 0.0
      %1676 = vmatpush1.msra.mxu0 0.0
      %1677 = vmatprep.subr.mxu0 0.0
      %1678 = vmatpush1.msra.mxu0 0.0
      %1679 = vmatprep.subr.mxu0 0.0
      %1680 = vmatpush1.msra.mxu0 0.0
      %1681 = vmatprep.subr.mxu0 0.0
      %1682 = vmatpush1.msra.mxu0 0.0
      %1683 = vmatprep.subr.mxu0 0.0
      %1684 = vmatpush1.msra.mxu0 0.0
      %1685 = vmatprep.subr.mxu0 0.0
      %1686 = vmatpush1.msra.mxu0 0.0
      %1687 = vmatprep.subr.mxu0 0.0
      %1688 = vmatpush1.msra.mxu0 0.0
      %1689 = vmatprep.subr.mxu0 0.0
      %1690 = vmatpush1.msra.mxu0 0.0
      %1691 = vmatprep.subr.mxu0 0.0
      %1692 = vmatpush1.msra.mxu0 0.0
      %1693 = vmatprep.subr.mxu0 0.0
      %1694 = vmatpush1.msra.mxu0 0.0
      %1695 = vmatprep.subr.mxu0 0.0
      %1696 = vmatpush1.msra.mxu0 0.0
      %1697 = vmatprep.subr.mxu0 0.0
      %1698 = vmatpush1.msra.mxu0 0.0
      %1699 = vmatprep.subr.mxu0 0.0
      %1700 = vmatpush1.msra.mxu0 0.0
      %1701 = vmatprep.subr.mxu0 0.0
      %1702 = vmatpush1.msra.mxu0 0.0
      %1703 = vmatprep.subr.mxu0 0.0
      %1704 = vmatpush1.msra.mxu0 0.0
      %1705 = vmatprep.subr.mxu0 0.0
      %1706 = vmatpush1.msra.mxu0 0.0
      %1707 = vmatprep.subr.mxu0 0.0
      %1708 = vmatpush1.msra.mxu0 0.0
      %1709 = vmatprep.subr.mxu0 0.0
      %1710 = vmatpush1.msra.mxu0 0.0
      %1711 = vmatprep.subr.mxu0 0.0
      %1712 = vmatpush1.msra.mxu0 0.0
      %1713 = vmatprep.mubr.f32.mxu0 0.0
      %1714 = vmatmul.mubr.f32.gmra.mrb[0].mxu0 %v1644
      %v1715 = vpop.f32.mrb[0].mxu0
      %v1716 = vadd.f32 %v1636, %v1715
      %v1717 = vpop.f32.mrb[0].mxu0
      %1718 = vmatprep.mubr.f32.mxu0 0.0
      %1719 = vmatmul.mubr.f32.gmra.mrb[0].mxu0 %v1647
      %v1720 = vpop.f32.mrb[0].mxu0
      %v1721 = vadd.f32 %v1641, %v1720
      %v1722 = vpop.f32.mrb[0].mxu0
      %1723 = vdwg.mxu0
      %v1724 = vtanh.pop %v1716
      %v1725 = vtanh.pop %v1721
      %v1726 = vmul.f32 %v1724, 1.442695
      %v1727 = vpow.pop %v1726
      %v1728 = vmul.f32 %v1455, %v1727
      %v1729 = vmul.f32 %v1725, 1.442695
      %v1730 = vpow.pop %v1729
      %v1731 = vmul.f32 %v1449, %v1730
      %1733 = vset.pattern.permute.xlu0 0
      %1734 = vperm.xlu0 %1733, %v1728
      %v1735 = vpop.permute.xlu0 %1734
      %1737 = vset.pattern.permute.xlu0 3
      %1738 = vperm.xlu0 %1737, %v1728
      %v1739 = vpop.permute.xlu0 %1738
      %1741 = vrot.lane.b32.xlu0 %v1728, 3
      %v1742 = vpop.permute.xlu0 %1741
      %v1744 = vsel %vm303, %v1735, %v1742
      %v1745 = vsel %vm311, %v1744, %v1739
      %1747 = vrot.lane.b32.xlu0 %v1745, 127
      %v1748 = vpop.permute.xlu0 %1747
      %1750 = vrot.lane.b32.xlu0 %v1745, 126
      %v1751 = vpop.permute.xlu0 %1750
      %1753 = vrot.lane.b32.xlu0 %v1745, 125
      %v1754 = vpop.permute.xlu0 %1753
      %1756 = vrot.lane.b32.xlu0 %v1745, 124
      %v1757 = vpop.permute.xlu0 %1756
      %1760 = vset.pattern.permute.xlu0 0
      %1761 = vperm.xlu0 %1760, %v1731
      %v1762 = vpop.permute.xlu0 %1761
      %1764 = vset.pattern.permute.xlu0 3
      %1765 = vperm.xlu0 %1764, %v1731
      %v1766 = vpop.permute.xlu0 %1765
      %1768 = vrot.lane.b32.xlu0 %v1731, 3
      %v1769 = vpop.permute.xlu0 %1768
      %v1771 = vsel %vm303, %v1762, %v1769
      %v1772 = vsel %vm311, %v1771, %v1766
      %1774 = vrot.lane.b32.xlu0 %v1772, 127
      %v1775 = vpop.permute.xlu0 %1774
      %1777 = vrot.lane.b32.xlu0 %v1772, 126
      %v1778 = vpop.permute.xlu0 %1777
      %1780 = vrot.lane.b32.xlu0 %v1772, 125
      %v1781 = vpop.permute.xlu0 %1780
      %1783 = vrot.lane.b32.xlu0 %v1772, 124
      %v1784 = vpop.permute.xlu0 %1783
      %s1786 = scalar_lea.vmem %s2, 80
      %v1787 = vld [vmem:[%s1786] sm:$0xff]
      %v1788 = vld [vmem:[%s1786 + $0x8] sm:$0xff]
      %s1789 = scalar_lea.vmem %s3, 80
      %v1790 = vld [vmem:[%s1789] sm:$0xff]
      %v1791 = vld [vmem:[%s1789 + $0x8] sm:$0xff]
      %1793 = vset.pattern.permute.xlu0 0
      %1794 = vperm.xlu0 %1793, %v1790
      %v1795 = vpop.permute.xlu0 %1794
      %1798 = vset.pattern.permute.xlu0 0
      %1799 = vperm.xlu0 %1798, %v1791
      %v1800 = vpop.permute.xlu0 %1799
      %v1803 = vsel %vm392, %v1787, 0
      %v1806 = vsel %vm392, %v1788, 0
      %1808 = vmatprep.subr.mxu0 0.0
      %1809 = vmatpush1.msra.mxu0 %v1745
      %1810 = vmatprep.subr.mxu0 0.0
      %1811 = vmatpush1.msra.mxu0 %v1748
      %1812 = vmatprep.subr.mxu0 0.0
      %1813 = vmatpush1.msra.mxu0 %v1751
      %1814 = vmatprep.subr.mxu0 0.0
      %1815 = vmatpush1.msra.mxu0 %v1754
      %1816 = vmatprep.subr.mxu0 0.0
      %1817 = vmatpush1.msra.mxu0 %v1757
      %1818 = vmatprep.subr.mxu0 0.0
      %1819 = vmatpush1.msra.mxu0 %v1772
      %1820 = vmatprep.subr.mxu0 0.0
      %1821 = vmatpush1.msra.mxu0 %v1775
      %1822 = vmatprep.subr.mxu0 0.0
      %1823 = vmatpush1.msra.mxu0 %v1778
      %1824 = vmatprep.subr.mxu0 0.0
      %1825 = vmatpush1.msra.mxu0 %v1781
      %1826 = vmatprep.subr.mxu0 0.0
      %1827 = vmatpush1.msra.mxu0 %v1784
      %1828 = vmatprep.subr.mxu0 0.0
      %1829 = vmatpush1.msra.mxu0 0.0
      %1830 = vmatprep.subr.mxu0 0.0
      %1831 = vmatpush1.msra.mxu0 0.0
      %1832 = vmatprep.subr.mxu0 0.0
      %1833 = vmatpush1.msra.mxu0 0.0
      %1834 = vmatprep.subr.mxu0 0.0
      %1835 = vmatpush1.msra.mxu0 0.0
      %1836 = vmatprep.subr.mxu0 0.0
      %1837 = vmatpush1.msra.mxu0 0.0
      %1838 = vmatprep.subr.mxu0 0.0
      %1839 = vmatpush1.msra.mxu0 0.0
      %1840 = vmatprep.subr.mxu0 0.0
      %1841 = vmatpush1.msra.mxu0 0.0
      %1842 = vmatprep.subr.mxu0 0.0
      %1843 = vmatpush1.msra.mxu0 0.0
      %1844 = vmatprep.subr.mxu0 0.0
      %1845 = vmatpush1.msra.mxu0 0.0
      %1846 = vmatprep.subr.mxu0 0.0
      %1847 = vmatpush1.msra.mxu0 0.0
      %1848 = vmatprep.subr.mxu0 0.0
      %1849 = vmatpush1.msra.mxu0 0.0
      %1850 = vmatprep.subr.mxu0 0.0
      %1851 = vmatpush1.msra.mxu0 0.0
      %1852 = vmatprep.subr.mxu0 0.0
      %1853 = vmatpush1.msra.mxu0 0.0
      %1854 = vmatprep.subr.mxu0 0.0
      %1855 = vmatpush1.msra.mxu0 0.0
      %1856 = vmatprep.subr.mxu0 0.0
      %1857 = vmatpush1.msra.mxu0 0.0
      %1858 = vmatprep.subr.mxu0 0.0
      %1859 = vmatpush1.msra.mxu0 0.0
      %1860 = vmatprep.subr.mxu0 0.0
      %1861 = vmatpush1.msra.mxu0 0.0
      %1862 = vmatprep.subr.mxu0 0.0
      %1863 = vmatpush1.msra.mxu0 0.0
      %1864 = vmatprep.subr.mxu0 0.0
      %1865 = vmatpush1.msra.mxu0 0.0
      %1866 = vmatprep.subr.mxu0 0.0
      %1867 = vmatpush1.msra.mxu0 0.0
      %1868 = vmatprep.subr.mxu0 0.0
      %1869 = vmatpush1.msra.mxu0 0.0
      %1870 = vmatprep.subr.mxu0 0.0
      %1871 = vmatpush1.msra.mxu0 0.0
      %1872 = vmatprep.mubr.f32.mxu0 0.0
      %1873 = vmatmul.mubr.f32.gmra.mrb[0].mxu0 %v1803
      %v1874 = vpop.f32.mrb[0].mxu0
      %v1875 = vadd.f32 %v1795, %v1874
      %v1876 = vpop.f32.mrb[0].mxu0
      %1877 = vmatprep.mubr.f32.mxu0 0.0
      %1878 = vmatmul.mubr.f32.gmra.mrb[0].mxu0 %v1806
      %v1879 = vpop.f32.mrb[0].mxu0
      %v1880 = vadd.f32 %v1800, %v1879
      %v1881 = vpop.f32.mrb[0].mxu0
      %1882 = vdwg.mxu0
      %vm1883 = vcmp.gt.f32.partialorder %v1875, 0.0
      %vm1884 = vcmp.gt.f32.partialorder %v1880, 0.0
      %v1885 = vmul.f32 %v1875, 0.01
      %v1886 = vmul.f32 %v1880, 0.01
      %v1887 = vsel %vm1883, %v1875, %v1885
      %v1888 = vsel %vm1884, %v1880, %v1886
      %s1889 = scalar_lea.vmem %s4, 80
      %v1890 = vld [vmem:[%s1889] sm:$0xff]
      %v1891 = vld [vmem:[%s1889 + $0x8] sm:$0xff]
      %1894 = vrot.lane.b32.xlu0 %v1887, 127
      %v1895 = vpop.permute.xlu0 %1894
      %1896 = vrot.lane.b32.xlu0 %v1888, 127
      %v1897 = vpop.permute.xlu0 %1896
      %1900 = vrot.lane.b32.xlu0 %v1887, 126
      %v1901 = vpop.permute.xlu0 %1900
      %1902 = vrot.lane.b32.xlu0 %v1888, 126
      %v1903 = vpop.permute.xlu0 %1902
      %s1906 = scalar_lea.vmem %s5, 80
      %v1907 = vld [vmem:[%s1906] sm:$0xff]
      %v1908 = vld [vmem:[%s1906 + $0x8] sm:$0xff]
      %1910 = vset.pattern.permute.xlu0 0
      %1911 = vperm.xlu0 %1910, %v1907
      %v1912 = vpop.permute.xlu0 %1911
      %1915 = vset.pattern.permute.xlu0 0
      %1916 = vperm.xlu0 %1915, %v1908
      %v1917 = vpop.permute.xlu0 %1916
      %v1920 = vsel %vm508, %v1890, 0
      %v1923 = vsel %vm508, %v1891, 0
      %1925 = vmatprep.subr.mxu0 0.0
      %1926 = vmatpush1.msra.mxu0 %v1887
      %1927 = vmatprep.subr.mxu0 0.0
      %1928 = vmatpush1.msra.mxu0 %v1888
      %1929 = vmatprep.subr.mxu0 0.0
      %1930 = vmatpush1.msra.mxu0 %v1895
      %1931 = vmatprep.subr.mxu0 0.0
      %1932 = vmatpush1.msra.mxu0 %v1897
      %1933 = vmatprep.subr.mxu0 0.0
      %1934 = vmatpush1.msra.mxu0 %v1901
      %1935 = vmatprep.subr.mxu0 0.0
      %1936 = vmatpush1.msra.mxu0 %v1903
      %1937 = vmatprep.subr.mxu0 0.0
      %1938 = vmatpush1.msra.mxu0 0.0
      %1939 = vmatprep.subr.mxu0 0.0
      %1940 = vmatpush1.msra.mxu0 0.0
      %1941 = vmatprep.subr.mxu0 0.0
      %1942 = vmatpush1.msra.mxu0 0.0
      %1943 = vmatprep.subr.mxu0 0.0
      %1944 = vmatpush1.msra.mxu0 0.0
      %1945 = vmatprep.subr.mxu0 0.0
      %1946 = vmatpush1.msra.mxu0 0.0
      %1947 = vmatprep.subr.mxu0 0.0
      %1948 = vmatpush1.msra.mxu0 0.0
      %1949 = vmatprep.subr.mxu0 0.0
      %1950 = vmatpush1.msra.mxu0 0.0
      %1951 = vmatprep.subr.mxu0 0.0
      %1952 = vmatpush1.msra.mxu0 0.0
      %1953 = vmatprep.subr.mxu0 0.0
      %1954 = vmatpush1.msra.mxu0 0.0
      %1955 = vmatprep.subr.mxu0 0.0
      %1956 = vmatpush1.msra.mxu0 0.0
      %1957 = vmatprep.subr.mxu0 0.0
      %1958 = vmatpush1.msra.mxu0 0.0
      %1959 = vmatprep.subr.mxu0 0.0
      %1960 = vmatpush1.msra.mxu0 0.0
      %1961 = vmatprep.subr.mxu0 0.0
      %1962 = vmatpush1.msra.mxu0 0.0
      %1963 = vmatprep.subr.mxu0 0.0
      %1964 = vmatpush1.msra.mxu0 0.0
      %1965 = vmatprep.subr.mxu0 0.0
      %1966 = vmatpush1.msra.mxu0 0.0
      %1967 = vmatprep.subr.mxu0 0.0
      %1968 = vmatpush1.msra.mxu0 0.0
      %1969 = vmatprep.subr.mxu0 0.0
      %1970 = vmatpush1.msra.mxu0 0.0
      %1971 = vmatprep.subr.mxu0 0.0
      %1972 = vmatpush1.msra.mxu0 0.0
      %1973 = vmatprep.subr.mxu0 0.0
      %1974 = vmatpush1.msra.mxu0 0.0
      %1975 = vmatprep.subr.mxu0 0.0
      %1976 = vmatpush1.msra.mxu0 0.0
      %1977 = vmatprep.subr.mxu0 0.0
      %1978 = vmatpush1.msra.mxu0 0.0
      %1979 = vmatprep.subr.mxu0 0.0
      %1980 = vmatpush1.msra.mxu0 0.0
      %1981 = vmatprep.subr.mxu0 0.0
      %1982 = vmatpush1.msra.mxu0 0.0
      %1983 = vmatprep.subr.mxu0 0.0
      %1984 = vmatpush1.msra.mxu0 0.0
      %1985 = vmatprep.subr.mxu0 0.0
      %1986 = vmatpush1.msra.mxu0 0.0
      %1987 = vmatprep.subr.mxu0 0.0
      %1988 = vmatpush1.msra.mxu0 0.0
      %1989 = vmatprep.mubr.f32.mxu0 0.0
      %1990 = vmatmul.mubr.f32.gmra.mrb[0].mxu0 %v1920
      %v1991 = vpop.f32.mrb[0].mxu0
      %v1992 = vadd.f32 %v1912, %v1991
      %v1993 = vpop.f32.mrb[0].mxu0
      %1994 = vmatprep.mubr.f32.mxu0 0.0
      %1995 = vmatmul.mubr.f32.gmra.mrb[0].mxu0 %v1923
      %v1996 = vpop.f32.mrb[0].mxu0
      %v1997 = vadd.f32 %v1917, %v1996
      %v1998 = vpop.f32.mrb[0].mxu0
      %1999 = vdwg.mxu0
      %v2000 = vtanh.pop %v1992
      %v2001 = vtanh.pop %v1997
      %v2002 = vadd.f32 %v1731, %v2000
      %v2003 = vsub.f32 %v1728, %v2001
      %2005 = vrot.lane.b32.xlu0 %v1435, 16
      %v2006 = vpop.permute.xlu0 %2005
      %2009 = vrot.lane.b32.xlu0 %v1436, 20
      %v2010 = vpop.permute.xlu0 %2009
      %2013 = vrot.lane.b32.xlu0 %v2002, 24
      %v2014 = vpop.permute.xlu0 %2013
      %2017 = vrot.lane.b32.xlu0 %v2003, 28
      %v2018 = vpop.permute.xlu0 %2017
      %vm2020 = vcmask 130048
      %v2021 = vsel %vm2020, %v276, %v2006
      %vm2022 = vcmask 162816
      %v2023 = vsel %vm2022, %v2021, %v2010
      %vm2024 = vcmask 195584
      %v2025 = vsel %vm2024, %v2023, %v2014
      %vm2026 = vcmask 228352
      %v2027 = vsel %vm2026, %v2025, %v2018
      %v2028 = vld [vmem:[%s6] sm:$0xff]
      %v2029 = vld [vmem:[%s6 + $0x8] sm:$0xff]
      %v2030 = vld [vmem:[%s6 + $0x10] sm:$0xff]
      %v2031 = vld [vmem:[%s6 + $0x18] sm:$0xff]
      %vm2032 = vcmask 261120
      %v2034 = vsel %vm2032, %v2027, 0
      %2036 = vmatprep.subr.mxu0 0.0
      %2037 = vmatpush1.msra.mxu0 %v2028
      %2038 = vmatprep.subr.mxu0 0.0
      %2039 = vmatpush1.msra.mxu0 %v2029
      %2040 = vmatprep.subr.mxu0 0.0
      %2041 = vmatpush1.msra.mxu0 %v2030
      %2042 = vmatprep.subr.mxu0 0.0
      %2043 = vmatpush1.msra.mxu0 %v2031
      %2044 = vmatprep.subr.mxu0 0.0
      %2045 = vmatpush1.msra.mxu0 0.0
      %2046 = vmatprep.subr.mxu0 0.0
      %2047 = vmatpush1.msra.mxu0 0.0
      %2048 = vmatprep.subr.mxu0 0.0
      %2049 = vmatpush1.msra.mxu0 0.0
      %2050 = vmatprep.subr.mxu0 0.0
      %2051 = vmatpush1.msra.mxu0 0.0
      %2052 = vmatprep.subr.mxu0 0.0
      %2053 = vmatpush1.msra.mxu0 0.0
      %2054 = vmatprep.subr.mxu0 0.0
      %2055 = vmatpush1.msra.mxu0 0.0
      %2056 = vmatprep.subr.mxu0 0.0
      %2057 = vmatpush1.msra.mxu0 0.0
      %2058 = vmatprep.subr.mxu0 0.0
      %2059 = vmatpush1.msra.mxu0 0.0
      %2060 = vmatprep.subr.mxu0 0.0
      %2061 = vmatpush1.msra.mxu0 0.0
      %2062 = vmatprep.subr.mxu0 0.0
      %2063 = vmatpush1.msra.mxu0 0.0
      %2064 = vmatprep.subr.mxu0 0.0
      %2065 = vmatpush1.msra.mxu0 0.0
      %2066 = vmatprep.subr.mxu0 0.0
      %2067 = vmatpush1.msra.mxu0 0.0
      %2068 = vmatprep.subr.mxu0 0.0
      %2069 = vmatpush1.msra.mxu0 0.0
      %2070 = vmatprep.subr.mxu0 0.0
      %2071 = vmatpush1.msra.mxu0 0.0
      %2072 = vmatprep.subr.mxu0 0.0
      %2073 = vmatpush1.msra.mxu0 0.0
      %2074 = vmatprep.subr.mxu0 0.0
      %2075 = vmatpush1.msra.mxu0 0.0
      %2076 = vmatprep.subr.mxu0 0.0
      %2077 = vmatpush1.msra.mxu0 0.0
      %2078 = vmatprep.subr.mxu0 0.0
      %2079 = vmatpush1.msra.mxu0 0.0
      %2080 = vmatprep.subr.mxu0 0.0
      %2081 = vmatpush1.msra.mxu0 0.0
      %2082 = vmatprep.subr.mxu0 0.0
      %2083 = vmatpush1.msra.mxu0 0.0
      %2084 = vmatprep.subr.mxu0 0.0
      %2085 = vmatpush1.msra.mxu0 0.0
      %2086 = vmatprep.subr.mxu0 0.0
      %2087 = vmatpush1.msra.mxu0 0.0
      %2088 = vmatprep.subr.mxu0 0.0
      %2089 = vmatpush1.msra.mxu0 0.0
      %2090 = vmatprep.subr.mxu0 0.0
      %2091 = vmatpush1.msra.mxu0 0.0
      %2092 = vmatprep.subr.mxu0 0.0
      %2093 = vmatpush1.msra.mxu0 0.0
      %2094 = vmatprep.subr.mxu0 0.0
      %2095 = vmatpush1.msra.mxu0 0.0
      %2096 = vmatprep.subr.mxu0 0.0
      %2097 = vmatpush1.msra.mxu0 0.0
      %2098 = vmatprep.subr.mxu0 0.0
      %2099 = vmatpush1.msra.mxu0 0.0
      %2100 = vmatprep.mubr.f32.mxu0 0.0
      %2101 = vmatmul.mubr.f32.gmra.mrb[0].mxu0 %v2034
      %v2102 = vpop.f32.mrb[0].mxu0
      %v2103 = vadd.f32 0.0, %v2102
      %v2104 = vpop.f32.mrb[0].mxu0
      %2105 = vdwg.mxu0
      %vm2106 = vcmask 64512
      %2107 = vst.msk [vmem:[%s273] sm:$0xff] %vm2106, %v2103
      %p2108 = scmp.lt.s32.totalorder %s18, 1
      %s2109 = scalar_select %p2108, %s18, 1
      %s2110 = smul.addr %s2109, 8
      %s2111 = scalar_lea.vmem %s7, %s2110
      // Predicated region
      $region49: #{model_forward_pallas.1} parent=47 // pred_check
        %p2112 = pneg %p188
      $region50: #{model_forward_pallas.1} parent=47 // pred_check_branch
        %2114 = sbr.rel (%p2112) target = $region52
      $region51: #{model_forward_pallas.1} parent=47 // pred_region
        _
      $region52: #{model_forward_pallas.1} parent=47 // pred_fallthru
        _
    $region48: #{model_forward_pallas.1} parent=5 // pred_fallthru
      _
    %p2115 = scmp.le.s32.totalorder 2, %s13
    // Predicated region
    $region53: #{model_forward_pallas.1} parent=5 // pred_check
      %p2116 = pneg %p2115
    $region54: #{model_forward_pallas.1} parent=5 // pred_check_branch
      %2118 = sbr.rel (%p2116) target = $region56
    $region55: #{model_forward_pallas.1} parent=5 // pred_region
      %s2119 = ssub.s32 %s13, 2
      // Predicated region
      $region57: #{model_forward_pallas.1} parent=55 // pred_check
        %p2120 = pneg %p194
      $region58: #{model_forward_pallas.1} parent=55 // pred_check_branch
        %2122 = sbr.rel (%p2120) target = $region60
      $region59: #{model_forward_pallas.1} parent=55 // pred_region
        %p2123 = scmp.lt.s32.totalorder %s19, 1
        %s2124 = scalar_select %p2123, %s19, 1
        %s2125 = smul.addr %s2124, 8
        %s2126 = scalar_lea.vmem %s7, %s2125
      $region60: #{model_forward_pallas.1} parent=55 // pred_fallthru
        _
    $region56: #{model_forward_pallas.1} parent=5 // pred_fallthru
      _
  $region6: #{model_forward_pallas.1} parent=0 // loop_footer
    %s17 = sadd.s32 1, %s13
  $region7: #{model_forward_pallas.1} parent=0 // loop_footer_branch
    %12 = sbr.rel target = $region3
  $region8: #{model_forward_pallas.1} parent=0 // loop_exit
    _

</llo_original>
